<compile_context>
chip_gen: v6e
topology: v6e:2x2x1
jax: 0.10.0
libtpu: 0.0.40
codegen_flags: <defaults>
</compile_context>

<pallas_src>
import functools

import jax
import jax.numpy as jnp
import numpy as np
from jax.experimental import pallas as pl
from jax.experimental.pallas import tpu as pltpu


# ----------------------- fused conv3x3 (as GEMM) + bias + ReLU [+ maxpool2x2] -----------------------

def _conv_gemm_kernel(p_ref, w_ref, b_ref, o_ref, *, pool):
    # p_ref: (M, 9*Cin) bf16  im2col patches for one image
    #        (pool=True: rows ordered as 4 pooling-window quarters of Mo rows each)
    # w_ref: (9*Cin, Cout) bf16
    # b_ref: (1, Cout) f32
    # o_ref: (Mo, Cout) f32   (Mo = H*W, or (H/2)*(W/2) when pool=True)
    acc = jnp.dot(p_ref[...], w_ref[...], preferred_element_type=jnp.float32)
    acc = jnp.maximum(acc + b_ref[...], 0.0)
    if pool:
        mo = o_ref.shape[0]
        # 2x2 maxpool == elementwise max of the 4 aligned row-slabs (no reshape).
        acc = jnp.maximum(jnp.maximum(acc[0:mo], acc[mo:2 * mo]),
                          jnp.maximum(acc[2 * mo:3 * mo], acc[3 * mo:4 * mo]))
    o_ref[...] = acc.astype(o_ref.dtype)


def conv3x3(x_nhwc, w, b, *, pool):
    """3x3 'same' conv (cross-correlation, matches nn.Conv2d) + bias + ReLU,
    optionally fused with a 2x2/stride-2 maxpool. Returns NHWC f32."""
    N, H, W, Cin = x_nhwc.shape
    Cout = w.shape[-1]

    # bf16 MXU inputs (f32 accumulation happens in the kernel).
    x_nhwc = x_nhwc.astype(jnp.bfloat16)
    w = w.astype(jnp.bfloat16)

    # Pad tiny channel counts (first conv: Cin=3) up to 8 with zeros; exact.
    if Cin < 8:
        pad = 8 - Cin
        x_nhwc = jnp.pad(x_nhwc, ((0, 0), (0, 0), (0, 0), (0, pad)))
        w = jnp.pad(w, ((0, 0), (0, 0), (0, pad), (0, 0)))
        Cin = 8
    K9 = 9 * Cin

    xp = jnp.pad(x_nhwc, ((0, 0), (1, 1), (1, 1), (0, 0)))   # spatial "same" padding

    if pool:
        assert H % 2 == 0 and W % 2 == 0
        Ho, Wo = H // 2, W // 2
        Mo = Ho * Wo
        # Rows pre-ordered by pooling-window quarter (dy2, dx2); within a quarter,
        # pooled raster order. Tap order (ky, kx, cin) matches w.reshape(9*Cin, Cout).
        slabs = []
        for dy2 in range(2):
            for dx2 in range(2):
                taps = [xp[:, dy2 + ky:dy2 + ky + 2 * Ho:2,
                             dx2 + kx:dx2 + kx + 2 * Wo:2, :]
                        for ky in range(3) for kx in range(3)]
                slabs.append(jnp.concatenate(taps, axis=-1).reshape(N, Mo, K9))
        patches = jnp.concatenate(slabs, axis=1)              # (N, 4*Mo, K9)
        M_in, M_out = 4 * Mo, Mo
        out_h, out_w = Ho, Wo
    else:
        taps = [xp[:, ky:ky + H, kx:kx + W, :] for ky in range(3) for kx in range(3)]
        patches = jnp.concatenate(taps, axis=-1).reshape(N, H * W, K9)
        M_in = M_out = H * W
        out_h, out_w = H, W

    w2 = w.reshape(K9, Cout)                                  # (ky, kx, cin) row-major
    b2 = b.reshape(1, Cout).astype(jnp.float32)

    out = pl.pallas_call(
        functools.partial(_conv_gemm_kernel, pool=pool),
        out_shape=jax.ShapeDtypeStruct((N, M_out, Cout), jnp.float32),
        grid_spec=pltpu.PrefetchScalarGridSpec(
            num_scalar_prefetch=0,
            grid=(N,),
            in_specs=[
                pl.BlockSpec((None, M_in, K9), lambda n: (n, 0, 0)),
                pl.BlockSpec((K9, Cout), lambda n: (0, 0)),
                pl.BlockSpec((1, Cout), lambda n: (0, 0)),
            ],
            out_specs=pl.BlockSpec((None, M_out, Cout), lambda n: (n, 0, 0)),
        ),
        compiler_params=pltpu.CompilerParams(dimension_semantics=("parallel",)),
    )(patches, w2, b2)

    return out.reshape(N, out_h, out_w, Cout)                 # contiguous relabel


# --------------------------------- VGG16map model ---------------------------------

_VGG_CFG = [(3, 64), (64, 64),                      # layer1 convs
            (64, 128), (128, 128),                  # layer2 convs
            (128, 256), (256, 256), (256, 256)]     # layer3 convs


def init_params(key):
    params = []
    for cin, cout in _VGG_CFG:
        key, kw, kb = jax.random.split(key, 3)
        scale = (2.0 / (9.0 * cin)) ** 0.5
        w = jax.random.normal(kw, (3, 3, cin, cout), jnp.float32) * scale
        b = jax.random.normal(kb, (cout,), jnp.float32) * 0.01
        params.append((w, b))
    return params


def vgg16map_forward(x_nchw, params):
    """Returns [pool1, pool2, pool3] in NCHW, like the PyTorch module."""
    x = jnp.transpose(x_nchw, (0, 2, 3, 1)).astype(jnp.float32)   # NCHW -> NHWC
    (w11, b11), (w12, b12), (w21, b21), (w22, b22), \
        (w31, b31), (w32, b32), (w33, b33) = params

    h = conv3x3(x, w11, b11, pool=False)
    pool1 = conv3x3(h, w12, b12, pool=True)

    h = conv3x3(pool1, w21, b21, pool=False)
    pool2 = conv3x3(h, w22, b22, pool=True)

    h = conv3x3(pool2, w31, b31, pool=False)
    h = conv3x3(h, w32, b32, pool=False)
    pool3 = conv3x3(h, w33, b33, pool=True)

    to_nchw = lambda t: jnp.transpose(t, (0, 3, 1, 2))
    return [to_nchw(pool1), to_nchw(pool2), to_nchw(pool3)]


# ------------------------------- pure-JAX reference --------------------------------
# Reference uses the same bf16-input / f32-accumulation quantization points as the
# kernel path, so per-layer differences are f32 summation-order only.

def _ref_conv(h, w, b, pool):
    y = jax.lax.conv_general_dilated(
        h.astype(jnp.bfloat16), w.astype(jnp.bfloat16),
        window_strides=(1, 1), padding="SAME",
        dimension_numbers=("NHWC", "HWIO", "NHWC"),
        preferred_element_type=jnp.float32)
    y = jnp.maximum(y + b.astype(jnp.float32), 0.0)
    if pool:
        N, H, W, C = y.shape
        y = y.reshape(N, H // 2, 2, W // 2, 2, C).max(axis=(2, 4))
    return y


def _ref_forward(x_nchw, params):
    x = jnp.transpose(x_nchw, (0, 2, 3, 1)).astype(jnp.float32)
    (w11, b11), (w12, b12), (w21, b21), (w22, b22), \
        (w31, b31), (w32, b32), (w33, b33) = params
    h = _ref_conv(x, w11, b11, False); p1 = _ref_conv(h, w12, b12, True)
    h = _ref_conv(p1, w21, b21, False); p2 = _ref_conv(h, w22, b22, True)
    h = _ref_conv(p2, w31, b31, False); h = _ref_conv(h, w32, b32, False)
    p3 = _ref_conv(h, w33, b33, True)
    to_nchw = lambda t: jnp.transpose(t, (0, 3, 1, 2))
    return [to_nchw(p1), to_nchw(p2), to_nchw(p3)]


# --------------------------------------- main --------------------------------------

if __name__ == "__main__":
    key = jax.random.PRNGKey(0)
    kx, kp = jax.random.split(key)

    x = jax.random.normal(kx, (2, 3, 32, 32), jnp.float32)   # NCHW, like PyTorch
    params = init_params(kp)

    # --- single-kernel correctness (tight tolerance: same bf16 inputs, f32 acc) ---
    x_nhwc = jnp.transpose(x, (0, 2, 3, 1))
    w0, b0 = params[0]
    for p in (False, True):
        got = jax.block_until_ready(conv3x3(x_nhwc, w0, b0, pool=p))
        want = _ref_conv(x_nhwc, w0, b0, p)
        np.testing.assert_allclose(np.asarray(got), np.asarray(want),
                                   rtol=1e-4, atol=1e-4)

    # --- full forward ---
    fwd = jax.jit(vgg16map_forward)
    outs = fwd(x, params)
    outs = [jax.block_until_ready(o) for o in outs]

    assert outs[0].shape == (2, 64, 16, 16)
    assert outs[1].shape == (2, 128, 8, 8)
    assert outs[2].shape == (2, 256, 4, 4)

    # End-to-end tolerance is looser: 7 stacked bf16-input convs let tiny f32
    # accumulation-order differences cross bf16 rounding boundaries (≈1 ulp ≈ 0.4%).
    ref_outs = jax.jit(_ref_forward)(x, params)
    for o, r in zip(outs, ref_outs):
        np.testing.assert_allclose(np.asarray(o), np.asarray(r), rtol=2e-2, atol=2e-2)

    print("KERNEL_OK")
</pallas_src>

<mosaic_0001>
module attributes {stable_mosaic.version = 11 : i64} {
  func.func @_conv_gemm_kernel(%arg0: i32, %arg1: memref<1x1024x72xbf16, #tpu.memory_space<vmem>>, %arg2: memref<72x64xbf16, #tpu.memory_space<vmem>>, %arg3: memref<1x64xf32, #tpu.memory_space<vmem>>, %arg4: memref<1x1024x64xf32, #tpu.memory_space<vmem>>) attributes {dimension_semantics = [#tpu.dimension_semantics<parallel>], iteration_bounds = array<i64: 2>, scalar_prefetch = 0 : i64, scratch_operands = 0 : i64, tpu.core_type = #tpu.core_type<tc>, window_params = [{transform_indices = @transform_0, window_bounds = array<i64: 1, 1024, 72>}, {pipeline_mode = #tpu.pipeline_mode<synchronous>, transform_indices = @transform_1, window_bounds = array<i64: 72, 64>}, {pipeline_mode = #tpu.pipeline_mode<synchronous>, transform_indices = @transform_2, window_bounds = array<i64: 1, 64>}, {transform_indices = @transform_3, window_bounds = array<i64: 1, 1024, 64>}]} {
    %c0 = arith.constant 0 : index
    %c0_0 = arith.constant 0 : index
    %c0_1 = arith.constant 0 : index
    %0 = vector.load %arg1[%c0, %c0_0, %c0_1] : memref<1x1024x72xbf16, #tpu.memory_space<vmem>>, vector<1x1024x72xbf16>
    %1 = vector.shape_cast %0 : vector<1x1024x72xbf16> to vector<1024x72xbf16>
    %c0_2 = arith.constant 0 : index
    %c0_3 = arith.constant 0 : index
    %2 = vector.load %arg2[%c0_2, %c0_3] : memref<72x64xbf16, #tpu.memory_space<vmem>>, vector<72x64xbf16>
    %cst = arith.constant dense<0.000000e+00> : vector<1024x64xf32>
    %3 = tpu.matmul %1, %2, %cst {dimension_numbers = #tpu.dot_dimension_numbers<[1], [0], [0], [1], [0, 0, 1, 1], [], []>} : vector<1024x72xbf16>, vector<72x64xbf16>, vector<1024x64xf32> -> vector<1024x64xf32>
    %c0_4 = arith.constant 0 : index
    %c0_5 = arith.constant 0 : index
    %4 = vector.load %arg3[%c0_4, %c0_5] : memref<1x64xf32, #tpu.memory_space<vmem>>, vector<1x64xf32>
    %5 = vector.broadcast %4 : vector<1x64xf32> to vector<1024x64xf32>
    %6 = arith.addf %3, %5 : vector<1024x64xf32>
    %cst_6 = arith.constant 0.000000e+00 : f32
    %7 = vector.broadcast %cst_6 : f32 to vector<1024x64xf32>
    %8 = arith.maximumf %6, %7 : vector<1024x64xf32>
    %c0_7 = arith.constant 0 : index
    %c0_8 = arith.constant 0 : index
    %c0_9 = arith.constant 0 : index
    %9 = vector.load %arg4[%c0_7, %c0_8, %c0_9] : memref<1x1024x64xf32, #tpu.memory_space<vmem>>, vector<1x1024x64xf32>
    %10 = vector.shape_cast %9 : vector<1x1024x64xf32> to vector<1024x64xf32>
    %11 = vector.shape_cast %8 : vector<1024x64xf32> to vector<1x1024x64xf32>
    tpu.vector_store %arg4[%c0_7, %c0_8, %c0_9], %11 {strides = array<i32>} : memref<1x1024x64xf32, #tpu.memory_space<vmem>>, vector<1x1024x64xf32>,
    return
  }
  func.func @transform_0(%arg0: i32) -> (i32, i32, i32) {
    %c0_i32 = arith.constant 0 : i32
    %c0_i32_0 = arith.constant 0 : i32
    %c0_i32_1 = arith.constant 0 : i32
    return %arg0, %c0_i32, %c0_i32_0 : i32, i32, i32
  }
  func.func @transform_1(%arg0: i32) -> (i32, i32) {
    %c0_i32 = arith.constant 0 : i32
    %c0_i32_0 = arith.constant 0 : i32
    %c0_i32_1 = arith.constant 0 : i32
    return %c0_i32, %c0_i32_0 : i32, i32
  }
  func.func @transform_2(%arg0: i32) -> (i32, i32) {
    %c0_i32 = arith.constant 0 : i32
    %c0_i32_0 = arith.constant 0 : i32
    %c0_i32_1 = arith.constant 0 : i32
    return %c0_i32, %c0_i32_0 : i32, i32
  }
  func.func @transform_3(%arg0: i32) -> (i32, i32, i32) {
    %c0_i32 = arith.constant 0 : i32
    %c0_i32_0 = arith.constant 0 : i32
    %c0_i32_1 = arith.constant 0 : i32
    return %arg0, %c0_i32, %c0_i32_0 : i32, i32, i32
  }
}

</mosaic_0001>

<llo_original>
// kernel: tpu_custom_call.1
$region0: #{tpu_custom_call.1}
  #allocation0 [shape = 'u32[]', space=smem, size = 0x4, offset = 0x4, fixed_abs, tag = 'smem constant byte address 0x4 - core index']
  #allocation1 [shape = 'u32[144,128]{1,0:T(1,128)}', space=vmem, size = 0x12000, scoped, tag = 'internal scratch']
  %s0 = inlined_call_operand.vmem [shape: bf16[2,1024,72], index: 0, kind: input, shape index: {}]
  %s1 = inlined_call_operand.vmem [shape: bf16[72,64], index: 1, kind: input, shape index: {}]
  %s2 = inlined_call_operand.vmem [shape: f32[1,64], index: 2, kind: input, shape index: {}]
  %s3 = inlined_call_operand.vmem [shape: f32[2,1024,64], index: 3, kind: output, shape index: {}]
  %s4 = sld [smem:[#allocation0]]
  $region45: #{tpu_custom_call.1} parent=0
    _
  %s6 = ssub.s32 1, %s4
  %s7 = scalar_select 0, %s6, %s4
  loop: start=0, step=1, limit=4
  $region2: #{tpu_custom_call.1} parent=0 // loop_pre_header
    _
  $region3: #{tpu_custom_call.1} parent=0 // loop_header
    %s9 = sphi 0, %s13
    %p10 = scmp.ge.s32.totalorder %s9, 4
    %s19 = sphi 0, %s21
    %s22 = sphi 0, %s19
    %s23 = sphi 0, %s22
    %s39 = sphi 0, %s23
    %s43 = sphi 0, %s43
    %s45 = sphi 0, %s43
    %s46 = sphi 0, %s45
    %s60 = sphi 0, %s46
    %s64 = sphi 0, %s64
    %s66 = sphi 0, %s64
    %s67 = sphi 0, %s66
    %s81 = sphi 0, %s67
    %s87 = sphi 0, %s89
    %s90 = sphi 0, %s87
    %s91 = sphi 0, %s90
    %s107 = sphi 0, %s91
  $region4: #{tpu_custom_call.1} parent=0 // loop_header_branch
    %12 = sbr.rel (%p10) target = $region8
  $region5: #{tpu_custom_call.1} parent=0 // loop_body
    %s14 = ssub.s32 %s9, 1
    %s15 = ssub.s32 %s9, 2
    %s16 = sadd.s32 %s9, 1
    %s17 = ssub.s32 %s9, %s16
    %p18 = scmp.eq.s32.totalorder %s17, 0
    %s20 = sadd.s32 %s19, 1
    %s21 = scalar_select %p18, %s19, %s20
    %p24 = pneg %p18
    %p25 = scmp.eq.s32.totalorder %s9, 1
    %p26 = por %p24, %p25
    %p27 = scmp.ne.s32.totalorder %s19, %s22
    %p28 = scmp.eq.s32.totalorder %s9, 0
    %p29 = por %p27, %p28
    %p30 = scmp.ne.s32.totalorder %s19, %s22
    %p31 = scmp.eq.s32.totalorder %s14, 1
    %p32 = por %p30, %p31
    %p33 = scmp.ne.s32.totalorder %s22, %s23
    %p34 = scmp.eq.s32.totalorder %s14, 0
    %p35 = por %p33, %p34
    %p36 = scmp.ne.s32.totalorder %s22, %s23
    %p37 = scmp.eq.s32.totalorder %s15, 1
    %p38 = por %p36, %p37
    %p40 = scmp.ne.s32.totalorder %s23, %s39
    %p41 = scmp.eq.s32.totalorder %s15, 0
    %p42 = por %p40, %p41
    %s44 = sadd.s32 %s43, 1
    %p47 = scmp.eq.s32.totalorder %s9, 1
    %p48 = scmp.ne.s32.totalorder %s43, %s45
    %p49 = scmp.eq.s32.totalorder %s9, 0
    %p50 = por %p48, %p49
    %p51 = scmp.ne.s32.totalorder %s43, %s45
    %p52 = scmp.eq.s32.totalorder %s14, 1
    %p53 = por %p51, %p52
    %p54 = scmp.ne.s32.totalorder %s45, %s46
    %p55 = scmp.eq.s32.totalorder %s14, 0
    %p56 = por %p54, %p55
    %p57 = scmp.ne.s32.totalorder %s45, %s46
    %p58 = scmp.eq.s32.totalorder %s15, 1
    %p59 = por %p57, %p58
    %p61 = scmp.ne.s32.totalorder %s46, %s60
    %p62 = scmp.eq.s32.totalorder %s15, 0
    %p63 = por %p61, %p62
    %s65 = sadd.s32 %s64, 1
    %p68 = scmp.eq.s32.totalorder %s9, 1
    %p69 = scmp.ne.s32.totalorder %s64, %s66
    %p70 = scmp.eq.s32.totalorder %s9, 0
    %p71 = por %p69, %p70
    %p72 = scmp.ne.s32.totalorder %s64, %s66
    %p73 = scmp.eq.s32.totalorder %s14, 1
    %p74 = por %p72, %p73
    %p75 = scmp.ne.s32.totalorder %s66, %s67
    %p76 = scmp.eq.s32.totalorder %s14, 0
    %p77 = por %p75, %p76
    %p78 = scmp.ne.s32.totalorder %s66, %s67
    %p79 = scmp.eq.s32.totalorder %s15, 1
    %p80 = por %p78, %p79
    %p82 = scmp.ne.s32.totalorder %s67, %s81
    %p83 = scmp.eq.s32.totalorder %s15, 0
    %p84 = por %p82, %p83
    %s85 = ssub.s32 %s9, %s16
    %p86 = scmp.eq.s32.totalorder %s85, 0
    %s88 = sadd.s32 %s87, 1
    %s89 = scalar_select %p86, %s87, %s88
    %p92 = pneg %p86
    %p93 = scmp.eq.s32.totalorder %s9, 1
    %p94 = por %p92, %p93
    %p95 = scmp.ne.s32.totalorder %s87, %s90
    %p96 = scmp.eq.s32.totalorder %s9, 0
    %p97 = por %p95, %p96
    %p98 = scmp.ne.s32.totalorder %s87, %s90
    %p99 = scmp.eq.s32.totalorder %s14, 1
    %p100 = por %p98, %p99
    %p101 = scmp.ne.s32.totalorder %s90, %s91
    %p102 = scmp.eq.s32.totalorder %s14, 0
    %p103 = por %p101, %p102
    %p104 = scmp.ne.s32.totalorder %s90, %s91
    %p105 = scmp.eq.s32.totalorder %s15, 1
    %p106 = por %p104, %p105
    %p108 = scmp.ne.s32.totalorder %s91, %s107
    %p109 = scmp.eq.s32.totalorder %s15, 0
    %p110 = por %p108, %p109
    %p111 = scmp.le.s32.totalorder 1, %s9
    %p112 = scmp.lt.s32.totalorder %s9, 3
    %p113 = pnand %p111, %p112
    %p114 = pneg %p113
    // Predicated region
    $region9: #{tpu_custom_call.1} parent=5 // pred_check
      _
    $region10: #{tpu_custom_call.1} parent=5 // pred_check_branch
      %116 = sbr.rel (%p113) target = $region12
    $region11: #{tpu_custom_call.1} parent=5 // pred_region
      %s117 = ssub.s32 %s9, 1
      // Predicated region
      $region13: #{tpu_custom_call.1} parent=11 // pred_check
        %p118 = pneg %p56
      $region14: #{tpu_custom_call.1} parent=11 // pred_check_branch
        %120 = sbr.rel (%p118) target = $region16
      $region15: #{tpu_custom_call.1} parent=11 // pred_region
        _
      $region16: #{tpu_custom_call.1} parent=11 // pred_fallthru
        _
      // Predicated region
      $region17: #{tpu_custom_call.1} parent=11 // pred_check
        %p121 = pneg %p77
      $region18: #{tpu_custom_call.1} parent=11 // pred_check_branch
        %123 = sbr.rel (%p121) target = $region20
      $region19: #{tpu_custom_call.1} parent=11 // pred_region
        _
      $region20: #{tpu_custom_call.1} parent=11 // pred_fallthru
        _
    $region12: #{tpu_custom_call.1} parent=5 // pred_fallthru
      _
    %p124 = scmp.lt.s32.totalorder %s9, 2
    // Predicated region
    $region21: #{tpu_custom_call.1} parent=5 // pred_check
      %p125 = pneg %p124
    $region22: #{tpu_custom_call.1} parent=5 // pred_check_branch
      %127 = sbr.rel (%p125) target = $region24
    $region23: #{tpu_custom_call.1} parent=5 // pred_region
      // Predicated region
      $region25: #{tpu_custom_call.1} parent=23 // pred_check
        %p128 = pneg %p29
      $region26: #{tpu_custom_call.1} parent=23 // pred_check_branch
        %130 = sbr.rel (%p128) target = $region28
      $region27: #{tpu_custom_call.1} parent=23 // pred_region
        %p131 = scmp.lt.s32.totalorder %s9, 1
        %s132 = scalar_select %p131, %s9, 1
        %s133 = smul.addr %s132, 128
        %s134 = smul.addr %s133, 4
        %s135 = scalar_lea.vmem %s0, %s134
      $region28: #{tpu_custom_call.1} parent=23 // pred_fallthru
        _
    $region24: #{tpu_custom_call.1} parent=5 // pred_fallthru
      _
    %p136 = scmp.le.s32.totalorder 1, %s9
    %p137 = scmp.lt.s32.totalorder %s9, 3
    %p138 = pnand %p136, %p137
    %p139 = pneg %p138
    // Predicated region
    $region29: #{tpu_custom_call.1} parent=5 // pred_check
      _
    $region30: #{tpu_custom_call.1} parent=5 // pred_check_branch
      %141 = sbr.rel (%p138) target = $region32
    $region31: #{tpu_custom_call.1} parent=5 // pred_region
      %s142 = ssub.s32 %s9, 1
      %p143 = scmp.lt.s32.totalorder %s14, 1
      %s144 = scalar_select %p143, %s14, 1
      %s145 = smul.addr %s144, 128
      %s146 = smul.addr %s145, 4
      %s147 = scalar_lea.vmem %s0, %s146
      %p148 = pneg %p35
      %p149 = pneg %p32
      %p150 = pneg %p56
      %p151 = pneg %p53
      %p152 = pneg %p77
      %p153 = pneg %p74
      %p154 = pneg %p103
      %p155 = pneg %p100
      %p156 = scmp.lt.s32.totalorder %s14, 1
      %s157 = scalar_select %p156, %s14, 1
      %s158 = smul.addr %s157, 128
      %s159 = smul.addr %s158, 8
      %s160 = scalar_lea.vmem %s3, %s159
      %p161 = scmp.lt.s32.totalorder %s14, 1
      %s162 = scalar_select %p161, %s14, 1
      %s163 = smul.addr %s162, 128
      %s164 = smul.addr %s163, 4
      %s165 = scalar_lea.vmem %s0, %s164
      %p166 = scmp.lt.s32.totalorder %s14, 1
      %s167 = scalar_select %p166, %s14, 1
      %s168 = smul.addr %s167, 128
      %s169 = smul.addr %s168, 8
      %s170 = scalar_lea.vmem %s3, %s169
      %v172 = vld [vmem:[%s165] sm:$0xf]
      %v173 = vld [vmem:[%s165 + $0x4] sm:$0xf]
      %v174 = vld [vmem:[%s165 + $0x8] sm:$0xf]
      %v175 = vld [vmem:[%s165 + $0xc] sm:$0xf]
      %v176 = vld [vmem:[%s165 + $0x10] sm:$0xf]
      %v177 = vld [vmem:[%s165 + $0x14] sm:$0xf]
      %v178 = vld [vmem:[%s165 + $0x18] sm:$0xf]
      %v179 = vld [vmem:[%s165 + $0x1c] sm:$0xf]
      %v180 = vld [vmem:[%s165 + $0x20] sm:$0xf]
      %v181 = vld [vmem:[%s165 + $0x24] sm:$0xf]
      %v182 = vld [vmem:[%s165 + $0x28] sm:$0xf]
      %v183 = vld [vmem:[%s165 + $0x2c] sm:$0xf]
      %v184 = vld [vmem:[%s165 + $0x30] sm:$0xf]
      %v185 = vld [vmem:[%s165 + $0x34] sm:$0xf]
      %v186 = vld [vmem:[%s165 + $0x38] sm:$0xf]
      %v187 = vld [vmem:[%s165 + $0x3c] sm:$0xf]
      %v188 = vld [vmem:[%s165 + $0x40] sm:$0xf]
      %v189 = vld [vmem:[%s165 + $0x44] sm:$0xf]
      %v190 = vld [vmem:[%s165 + $0x48] sm:$0xf]
      %v191 = vld [vmem:[%s165 + $0x4c] sm:$0xf]
      %v192 = vld [vmem:[%s165 + $0x50] sm:$0xf]
      %v193 = vld [vmem:[%s165 + $0x54] sm:$0xf]
      %v194 = vld [vmem:[%s165 + $0x58] sm:$0xf]
      %v195 = vld [vmem:[%s165 + $0x5c] sm:$0xf]
      %v196 = vld [vmem:[%s165 + $0x60] sm:$0xf]
      %v197 = vld [vmem:[%s165 + $0x64] sm:$0xf]
      %v198 = vld [vmem:[%s165 + $0x68] sm:$0xf]
      %v199 = vld [vmem:[%s165 + $0x6c] sm:$0xf]
      %v200 = vld [vmem:[%s165 + $0x70] sm:$0xf]
      %v201 = vld [vmem:[%s165 + $0x74] sm:$0xf]
      %v202 = vld [vmem:[%s165 + $0x78] sm:$0xf]
      %v203 = vld [vmem:[%s165 + $0x7c] sm:$0xf]
      %v204 = vld [vmem:[%s165 + $0x80] sm:$0xf]
      %v205 = vld [vmem:[%s165 + $0x84] sm:$0xf]
      %v206 = vld [vmem:[%s165 + $0x88] sm:$0xf]
      %v207 = vld [vmem:[%s165 + $0x8c] sm:$0xf]
      %v208 = vld [vmem:[%s165 + $0x90] sm:$0xf]
      %v209 = vld [vmem:[%s165 + $0x94] sm:$0xf]
      %v210 = vld [vmem:[%s165 + $0x98] sm:$0xf]
      %v211 = vld [vmem:[%s165 + $0x9c] sm:$0xf]
      %v212 = vld [vmem:[%s165 + $0xa0] sm:$0xf]
      %v213 = vld [vmem:[%s165 + $0xa4] sm:$0xf]
      %v214 = vld [vmem:[%s165 + $0xa8] sm:$0xf]
      %v215 = vld [vmem:[%s165 + $0xac] sm:$0xf]
      %v216 = vld [vmem:[%s165 + $0xb0] sm:$0xf]
      %v217 = vld [vmem:[%s165 + $0xb4] sm:$0xf]
      %v218 = vld [vmem:[%s165 + $0xb8] sm:$0xf]
      %v219 = vld [vmem:[%s165 + $0xbc] sm:$0xf]
      %v220 = vld [vmem:[%s165 + $0xc0] sm:$0xf]
      %v221 = vld [vmem:[%s165 + $0xc4] sm:$0xf]
      %v222 = vld [vmem:[%s165 + $0xc8] sm:$0xf]
      %v223 = vld [vmem:[%s165 + $0xcc] sm:$0xf]
      %v224 = vld [vmem:[%s165 + $0xd0] sm:$0xf]
      %v225 = vld [vmem:[%s165 + $0xd4] sm:$0xf]
      %v226 = vld [vmem:[%s165 + $0xd8] sm:$0xf]
      %v227 = vld [vmem:[%s165 + $0xdc] sm:$0xf]
      %v228 = vld [vmem:[%s165 + $0xe0] sm:$0xf]
      %v229 = vld [vmem:[%s165 + $0xe4] sm:$0xf]
      %v230 = vld [vmem:[%s165 + $0xe8] sm:$0xf]
      %v231 = vld [vmem:[%s165 + $0xec] sm:$0xf]
      %v232 = vld [vmem:[%s165 + $0xf0] sm:$0xf]
      %v233 = vld [vmem:[%s165 + $0xf4] sm:$0xf]
      %v234 = vld [vmem:[%s165 + $0xf8] sm:$0xf]
      %v235 = vld [vmem:[%s165 + $0xfc] sm:$0xf]
      %v236 = vld [vmem:[%s165 + $0x100] sm:$0xf]
      %v237 = vld [vmem:[%s165 + $0x104] sm:$0xf]
      %v238 = vld [vmem:[%s165 + $0x108] sm:$0xf]
      %v239 = vld [vmem:[%s165 + $0x10c] sm:$0xf]
      %v240 = vld [vmem:[%s165 + $0x110] sm:$0xf]
      %v241 = vld [vmem:[%s165 + $0x114] sm:$0xf]
      %v242 = vld [vmem:[%s165 + $0x118] sm:$0xf]
      %v243 = vld [vmem:[%s165 + $0x11c] sm:$0xf]
      %v244 = vld [vmem:[%s165 + $0x120] sm:$0xf]
      %v245 = vld [vmem:[%s165 + $0x124] sm:$0xf]
      %v246 = vld [vmem:[%s165 + $0x128] sm:$0xf]
      %v247 = vld [vmem:[%s165 + $0x12c] sm:$0xf]
      %v248 = vld [vmem:[%s165 + $0x130] sm:$0xf]
      %v249 = vld [vmem:[%s165 + $0x134] sm:$0xf]
      %v250 = vld [vmem:[%s165 + $0x138] sm:$0xf]
      %v251 = vld [vmem:[%s165 + $0x13c] sm:$0xf]
      %v252 = vld [vmem:[%s165 + $0x140] sm:$0xf]
      %v253 = vld [vmem:[%s165 + $0x144] sm:$0xf]
      %v254 = vld [vmem:[%s165 + $0x148] sm:$0xf]
      %v255 = vld [vmem:[%s165 + $0x14c] sm:$0xf]
      %v256 = vld [vmem:[%s165 + $0x150] sm:$0xf]
      %v257 = vld [vmem:[%s165 + $0x154] sm:$0xf]
      %v258 = vld [vmem:[%s165 + $0x158] sm:$0xf]
      %v259 = vld [vmem:[%s165 + $0x15c] sm:$0xf]
      %v260 = vld [vmem:[%s165 + $0x160] sm:$0xf]
      %v261 = vld [vmem:[%s165 + $0x164] sm:$0xf]
      %v262 = vld [vmem:[%s165 + $0x168] sm:$0xf]
      %v263 = vld [vmem:[%s165 + $0x16c] sm:$0xf]
      %v264 = vld [vmem:[%s165 + $0x170] sm:$0xf]
      %v265 = vld [vmem:[%s165 + $0x174] sm:$0xf]
      %v266 = vld [vmem:[%s165 + $0x178] sm:$0xf]
      %v267 = vld [vmem:[%s165 + $0x17c] sm:$0xf]
      %v268 = vld [vmem:[%s165 + $0x180] sm:$0xf]
      %v269 = vld [vmem:[%s165 + $0x184] sm:$0xf]
      %v270 = vld [vmem:[%s165 + $0x188] sm:$0xf]
      %v271 = vld [vmem:[%s165 + $0x18c] sm:$0xf]
      %v272 = vld [vmem:[%s165 + $0x190] sm:$0xf]
      %v273 = vld [vmem:[%s165 + $0x194] sm:$0xf]
      %v274 = vld [vmem:[%s165 + $0x198] sm:$0xf]
      %v275 = vld [vmem:[%s165 + $0x19c] sm:$0xf]
      %v276 = vld [vmem:[%s165 + $0x1a0] sm:$0xf]
      %v277 = vld [vmem:[%s165 + $0x1a4] sm:$0xf]
      %v278 = vld [vmem:[%s165 + $0x1a8] sm:$0xf]
      %v279 = vld [vmem:[%s165 + $0x1ac] sm:$0xf]
      %v280 = vld [vmem:[%s165 + $0x1b0] sm:$0xf]
      %v281 = vld [vmem:[%s165 + $0x1b4] sm:$0xf]
      %v282 = vld [vmem:[%s165 + $0x1b8] sm:$0xf]
      %v283 = vld [vmem:[%s165 + $0x1bc] sm:$0xf]
      %v284 = vld [vmem:[%s165 + $0x1c0] sm:$0xf]
      %v285 = vld [vmem:[%s165 + $0x1c4] sm:$0xf]
      %v286 = vld [vmem:[%s165 + $0x1c8] sm:$0xf]
      %v287 = vld [vmem:[%s165 + $0x1cc] sm:$0xf]
      %v288 = vld [vmem:[%s165 + $0x1d0] sm:$0xf]
      %v289 = vld [vmem:[%s165 + $0x1d4] sm:$0xf]
      %v290 = vld [vmem:[%s165 + $0x1d8] sm:$0xf]
      %v291 = vld [vmem:[%s165 + $0x1dc] sm:$0xf]
      %v292 = vld [vmem:[%s165 + $0x1e0] sm:$0xf]
      %v293 = vld [vmem:[%s165 + $0x1e4] sm:$0xf]
      %v294 = vld [vmem:[%s165 + $0x1e8] sm:$0xf]
      %v295 = vld [vmem:[%s165 + $0x1ec] sm:$0xf]
      %v296 = vld [vmem:[%s165 + $0x1f0] sm:$0xf]
      %v297 = vld [vmem:[%s165 + $0x1f4] sm:$0xf]
      %v298 = vld [vmem:[%s165 + $0x1f8] sm:$0xf]
      %v299 = vld [vmem:[%s165 + $0x1fc] sm:$0xf]
      %v300 = vld [vmem:[%s1] sm:$0xf]
      %v301 = vld [vmem:[%s1 + $0x4] sm:$0xf]
      %v302 = vld [vmem:[%s1 + $0x8] sm:$0xf]
      %v303 = vld [vmem:[%s1 + $0xc] sm:$0xf]
      %v304 = vld [vmem:[%s1 + $0x10] sm:$0xf]
      %v305 = vld [vmem:[%s1 + $0x14] sm:$0xf]
      %v306 = vld [vmem:[%s1 + $0x18] sm:$0xf]
      %v307 = vld [vmem:[%s1 + $0x1c] sm:$0xf]
      %v308 = vld [vmem:[%s1 + $0x20] sm:$0xf]
      %v309 = vld [vmem:[%s2] sm:$0x1]
      %v311 = vlaneseq
      %v312 = vshrl.u32 %v311, 7
      %v313 = vsub.s32 0, %v312
      %v314 = vrot.slane %v309, %v313
      %v444 = vunpack.c.l.b16 %v172
      %v445 = vunpack.c.l.b16 %v173
      %v446 = vunpack.c.l.b16 %v174
      %v447 = vunpack.c.l.b16 %v175
      %v448 = vunpack.c.l.b16 %v176
      %v449 = vunpack.c.l.b16 %v177
      %v450 = vunpack.c.l.b16 %v178
      %v451 = vunpack.c.l.b16 %v179
      %v452 = vunpack.c.l.b16 %v180
      %v453 = vunpack.c.l.b16 %v181
      %v454 = vunpack.c.l.b16 %v182
      %v455 = vunpack.c.l.b16 %v183
      %v456 = vunpack.c.l.b16 %v184
      %v457 = vunpack.c.l.b16 %v185
      %v458 = vunpack.c.l.b16 %v186
      %v459 = vunpack.c.l.b16 %v187
      %v460 = vunpack.c.l.b16 %v188
      %v461 = vunpack.c.l.b16 %v189
      %v462 = vunpack.c.l.b16 %v190
      %v463 = vunpack.c.l.b16 %v191
      %v464 = vunpack.c.l.b16 %v192
      %v465 = vunpack.c.l.b16 %v193
      %v466 = vunpack.c.l.b16 %v194
      %v467 = vunpack.c.l.b16 %v195
      %v468 = vunpack.c.l.b16 %v196
      %v469 = vunpack.c.l.b16 %v197
      %v470 = vunpack.c.l.b16 %v198
      %v471 = vunpack.c.l.b16 %v199
      %v472 = vunpack.c.l.b16 %v200
      %v473 = vunpack.c.l.b16 %v201
      %v474 = vunpack.c.l.b16 %v202
      %v475 = vunpack.c.l.b16 %v203
      %v476 = vunpack.c.l.b16 %v204
      %v477 = vunpack.c.l.b16 %v205
      %v478 = vunpack.c.l.b16 %v206
      %v479 = vunpack.c.l.b16 %v207
      %v480 = vunpack.c.l.b16 %v208
      %v481 = vunpack.c.l.b16 %v209
      %v482 = vunpack.c.l.b16 %v210
      %v483 = vunpack.c.l.b16 %v211
      %v484 = vunpack.c.l.b16 %v212
      %v485 = vunpack.c.l.b16 %v213
      %v486 = vunpack.c.l.b16 %v214
      %v487 = vunpack.c.l.b16 %v215
      %v488 = vunpack.c.l.b16 %v216
      %v489 = vunpack.c.l.b16 %v217
      %v490 = vunpack.c.l.b16 %v218
      %v491 = vunpack.c.l.b16 %v219
      %v492 = vunpack.c.l.b16 %v220
      %v493 = vunpack.c.l.b16 %v221
      %v494 = vunpack.c.l.b16 %v222
      %v495 = vunpack.c.l.b16 %v223
      %v496 = vunpack.c.l.b16 %v224
      %v497 = vunpack.c.l.b16 %v225
      %v498 = vunpack.c.l.b16 %v226
      %v499 = vunpack.c.l.b16 %v227
      %v500 = vunpack.c.l.b16 %v228
      %v501 = vunpack.c.l.b16 %v229
      %v502 = vunpack.c.l.b16 %v230
      %v503 = vunpack.c.l.b16 %v231
      %v504 = vunpack.c.l.b16 %v232
      %v505 = vunpack.c.l.b16 %v233
      %v506 = vunpack.c.l.b16 %v234
      %v507 = vunpack.c.l.b16 %v235
      %v508 = vunpack.c.l.b16 %v236
      %v509 = vunpack.c.l.b16 %v237
      %v510 = vunpack.c.l.b16 %v238
      %v511 = vunpack.c.l.b16 %v239
      %v512 = vunpack.c.l.b16 %v240
      %v513 = vunpack.c.l.b16 %v241
      %v514 = vunpack.c.l.b16 %v242
      %v515 = vunpack.c.l.b16 %v243
      %v516 = vunpack.c.l.b16 %v244
      %v517 = vunpack.c.l.b16 %v245
      %v518 = vunpack.c.l.b16 %v246
      %v519 = vunpack.c.l.b16 %v247
      %v520 = vunpack.c.l.b16 %v248
      %v521 = vunpack.c.l.b16 %v249
      %v522 = vunpack.c.l.b16 %v250
      %v523 = vunpack.c.l.b16 %v251
      %v524 = vunpack.c.l.b16 %v252
      %v525 = vunpack.c.l.b16 %v253
      %v526 = vunpack.c.l.b16 %v254
      %v527 = vunpack.c.l.b16 %v255
      %v528 = vunpack.c.l.b16 %v256
      %v529 = vunpack.c.l.b16 %v257
      %v530 = vunpack.c.l.b16 %v258
      %v531 = vunpack.c.l.b16 %v259
      %v532 = vunpack.c.l.b16 %v260
      %v533 = vunpack.c.l.b16 %v261
      %v534 = vunpack.c.l.b16 %v262
      %v535 = vunpack.c.l.b16 %v263
      %v536 = vunpack.c.l.b16 %v264
      %v537 = vunpack.c.l.b16 %v265
      %v538 = vunpack.c.l.b16 %v266
      %v539 = vunpack.c.l.b16 %v267
      %v540 = vunpack.c.l.b16 %v268
      %v541 = vunpack.c.l.b16 %v269
      %v542 = vunpack.c.l.b16 %v270
      %v543 = vunpack.c.l.b16 %v271
      %v544 = vunpack.c.l.b16 %v272
      %v545 = vunpack.c.l.b16 %v273
      %v546 = vunpack.c.l.b16 %v274
      %v547 = vunpack.c.l.b16 %v275
      %v548 = vunpack.c.l.b16 %v276
      %v549 = vunpack.c.l.b16 %v277
      %v550 = vunpack.c.l.b16 %v278
      %v551 = vunpack.c.l.b16 %v279
      %v552 = vunpack.c.l.b16 %v280
      %v553 = vunpack.c.l.b16 %v281
      %v554 = vunpack.c.l.b16 %v282
      %v555 = vunpack.c.l.b16 %v283
      %v556 = vunpack.c.l.b16 %v284
      %v557 = vunpack.c.l.b16 %v285
      %v558 = vunpack.c.l.b16 %v286
      %v559 = vunpack.c.l.b16 %v287
      %v560 = vunpack.c.l.b16 %v288
      %v561 = vunpack.c.l.b16 %v289
      %v562 = vunpack.c.l.b16 %v290
      %v563 = vunpack.c.l.b16 %v291
      %v564 = vunpack.c.l.b16 %v292
      %v565 = vunpack.c.l.b16 %v293
      %v566 = vunpack.c.l.b16 %v294
      %v567 = vunpack.c.l.b16 %v295
      %v568 = vunpack.c.l.b16 %v296
      %v569 = vunpack.c.l.b16 %v297
      %v570 = vunpack.c.l.b16 %v298
      %v571 = vunpack.c.l.b16 %v299
      %v572 = vpack.c.b16 %v445, %v444
      %v573 = vpack.c.b16 %v447, %v446
      %v574 = vpack.c.b16 %v449, %v448
      %v575 = vpack.c.b16 %v451, %v450
      %v576 = vpack.c.b16 %v453, %v452
      %v577 = vpack.c.b16 %v455, %v454
      %v578 = vpack.c.b16 %v457, %v456
      %v579 = vpack.c.b16 %v459, %v458
      %v580 = vpack.c.b16 %v461, %v460
      %v581 = vpack.c.b16 %v463, %v462
      %v582 = vpack.c.b16 %v465, %v464
      %v583 = vpack.c.b16 %v467, %v466
      %v584 = vpack.c.b16 %v469, %v468
      %v585 = vpack.c.b16 %v471, %v470
      %v586 = vpack.c.b16 %v473, %v472
      %v587 = vpack.c.b16 %v475, %v474
      %v588 = vpack.c.b16 %v477, %v476
      %v589 = vpack.c.b16 %v479, %v478
      %v590 = vpack.c.b16 %v481, %v480
      %v591 = vpack.c.b16 %v483, %v482
      %v592 = vpack.c.b16 %v485, %v484
      %v593 = vpack.c.b16 %v487, %v486
      %v594 = vpack.c.b16 %v489, %v488
      %v595 = vpack.c.b16 %v491, %v490
      %v596 = vpack.c.b16 %v493, %v492
      %v597 = vpack.c.b16 %v495, %v494
      %v598 = vpack.c.b16 %v497, %v496
      %v599 = vpack.c.b16 %v499, %v498
      %v600 = vpack.c.b16 %v501, %v500
      %v601 = vpack.c.b16 %v503, %v502
      %v602 = vpack.c.b16 %v505, %v504
      %v603 = vpack.c.b16 %v507, %v506
      %v604 = vpack.c.b16 %v509, %v508
      %v605 = vpack.c.b16 %v511, %v510
      %v606 = vpack.c.b16 %v513, %v512
      %v607 = vpack.c.b16 %v515, %v514
      %v608 = vpack.c.b16 %v517, %v516
      %v609 = vpack.c.b16 %v519, %v518
      %v610 = vpack.c.b16 %v521, %v520
      %v611 = vpack.c.b16 %v523, %v522
      %v612 = vpack.c.b16 %v525, %v524
      %v613 = vpack.c.b16 %v527, %v526
      %v614 = vpack.c.b16 %v529, %v528
      %v615 = vpack.c.b16 %v531, %v530
      %v616 = vpack.c.b16 %v533, %v532
      %v617 = vpack.c.b16 %v535, %v534
      %v618 = vpack.c.b16 %v537, %v536
      %v619 = vpack.c.b16 %v539, %v538
      %v620 = vpack.c.b16 %v541, %v540
      %v621 = vpack.c.b16 %v543, %v542
      %v622 = vpack.c.b16 %v545, %v544
      %v623 = vpack.c.b16 %v547, %v546
      %v624 = vpack.c.b16 %v549, %v548
      %v625 = vpack.c.b16 %v551, %v550
      %v626 = vpack.c.b16 %v553, %v552
      %v627 = vpack.c.b16 %v555, %v554
      %v628 = vpack.c.b16 %v557, %v556
      %v629 = vpack.c.b16 %v559, %v558
      %v630 = vpack.c.b16 %v561, %v560
      %v631 = vpack.c.b16 %v563, %v562
      %v632 = vpack.c.b16 %v565, %v564
      %v633 = vpack.c.b16 %v567, %v566
      %v634 = vpack.c.b16 %v569, %v568
      %v635 = vpack.c.b16 %v571, %v570
      %v645 = vunpack.c.l.b16 %v300
      %v646 = vunpack.c.l.b16 %v301
      %v647 = vunpack.c.l.b16 %v302
      %v648 = vunpack.c.l.b16 %v303
      %v649 = vunpack.c.l.b16 %v304
      %v650 = vunpack.c.l.b16 %v305
      %v651 = vunpack.c.l.b16 %v306
      %v652 = vunpack.c.l.b16 %v307
      %v653 = vunpack.c.l.b16 %v308
      %v654 = vpack.c.b16 %v646, %v645
      %v655 = vpack.c.b16 %v648, %v647
      %v656 = vpack.c.b16 %v650, %v649
      %v657 = vpack.c.b16 %v652, %v651
      %v658 = vpack.c.b16 %v653, %v653
      %vm663 = vcmask 588800
      %v665 = vsel %vm663, %v572, 0
      %v668 = vsel %vm663, %v573, 0
      %v671 = vsel %vm663, %v574, 0
      %v674 = vsel %vm663, %v575, 0
      %v677 = vsel %vm663, %v576, 0
      %v680 = vsel %vm663, %v577, 0
      %v683 = vsel %vm663, %v578, 0
      %v686 = vsel %vm663, %v579, 0
      %v689 = vsel %vm663, %v580, 0
      %v692 = vsel %vm663, %v581, 0
      %v695 = vsel %vm663, %v582, 0
      %v698 = vsel %vm663, %v583, 0
      %v701 = vsel %vm663, %v584, 0
      %v704 = vsel %vm663, %v585, 0
      %v707 = vsel %vm663, %v586, 0
      %v710 = vsel %vm663, %v587, 0
      %v713 = vsel %vm663, %v588, 0
      %v716 = vsel %vm663, %v589, 0
      %v719 = vsel %vm663, %v590, 0
      %v722 = vsel %vm663, %v591, 0
      %v725 = vsel %vm663, %v592, 0
      %v728 = vsel %vm663, %v593, 0
      %v731 = vsel %vm663, %v594, 0
      %v734 = vsel %vm663, %v595, 0
      %v737 = vsel %vm663, %v596, 0
      %v740 = vsel %vm663, %v597, 0
      %v743 = vsel %vm663, %v598, 0
      %v746 = vsel %vm663, %v599, 0
      %v749 = vsel %vm663, %v600, 0
      %v752 = vsel %vm663, %v601, 0
      %v755 = vsel %vm663, %v602, 0
      %v758 = vsel %vm663, %v603, 0
      %v761 = vsel %vm663, %v604, 0
      %v764 = vsel %vm663, %v605, 0
      %v767 = vsel %vm663, %v606, 0
      %v770 = vsel %vm663, %v607, 0
      %v773 = vsel %vm663, %v608, 0
      %v776 = vsel %vm663, %v609, 0
      %v779 = vsel %vm663, %v610, 0
      %v782 = vsel %vm663, %v611, 0
      %v785 = vsel %vm663, %v612, 0
      %v788 = vsel %vm663, %v613, 0
      %v791 = vsel %vm663, %v614, 0
      %v794 = vsel %vm663, %v615, 0
      %v797 = vsel %vm663, %v616, 0
      %v800 = vsel %vm663, %v617, 0
      %v803 = vsel %vm663, %v618, 0
      %v806 = vsel %vm663, %v619, 0
      %v809 = vsel %vm663, %v620, 0
      %v812 = vsel %vm663, %v621, 0
      %v815 = vsel %vm663, %v622, 0
      %v818 = vsel %vm663, %v623, 0
      %v821 = vsel %vm663, %v624, 0
      %v824 = vsel %vm663, %v625, 0
      %v827 = vsel %vm663, %v626, 0
      %v830 = vsel %vm663, %v627, 0
      %v833 = vsel %vm663, %v628, 0
      %v836 = vsel %vm663, %v629, 0
      %v839 = vsel %vm663, %v630, 0
      %v842 = vsel %vm663, %v631, 0
      %v845 = vsel %vm663, %v632, 0
      %v848 = vsel %vm663, %v633, 0
      %v851 = vsel %vm663, %v634, 0
      %v854 = vsel %vm663, %v635, 0
      %vm856 = vcmask 1043456
      %v858 = vsel %vm856, %v658, 0
      %860 = vmatprep.subr.bf16.mxu0 0
      %861 = vmatpush1.bf16.msra.mxu0 0
      %862 = vmatprep.subr.bf16.mxu0 0
      %863 = vmatpush1.bf16.msra.mxu0 0
      %864 = vmatprep.subr.bf16.mxu0 0
      %865 = vmatpush1.bf16.msra.mxu0 0
      %866 = vmatprep.subr.bf16.mxu0 0
      %867 = vmatpush1.bf16.msra.mxu0 %v858
      %868 = vmatprep.subr.bf16.mxu0 0
      %869 = vmatpush1.bf16.msra.mxu0 %v657
      %870 = vmatprep.subr.bf16.mxu0 0
      %871 = vmatpush1.bf16.msra.mxu0 %v656
      %872 = vmatprep.subr.bf16.mxu0 0
      %873 = vmatpush1.bf16.msra.mxu0 %v655
      %874 = vmatprep.subr.bf16.mxu0 0
      %875 = vmatpush1.bf16.msra.mxu0 %v654
      %876 = vmatprep.subr.bf16.mxu0 0
      %877 = vmatpush2.bf16.msra.mxu0 0
      %878 = vmatprep.subr.bf16.mxu0 0
      %879 = vmatpush2.bf16.msra.mxu0 0
      %880 = vmatprep.subr.bf16.mxu0 0
      %881 = vmatpush2.bf16.msra.mxu0 0
      %882 = vmatprep.subr.bf16.mxu0 0
      %883 = vmatpush2.bf16.msra.mxu0 0
      %884 = vmatprep.subr.bf16.mxu0 0
      %885 = vmatpush2.bf16.msra.mxu0 0
      %886 = vmatprep.subr.bf16.mxu0 0
      %887 = vmatpush2.bf16.msra.mxu0 0
      %888 = vmatprep.subr.bf16.mxu0 0
      %889 = vmatpush2.bf16.msra.mxu0 0
      %890 = vmatprep.subr.bf16.mxu0 0
      %891 = vmatpush2.bf16.msra.mxu0 0
      %892 = vmatprep.mubr.bf16.mxu0 0
      %893 = vmatmul.mubr.bf16.gmra.mxu0 %v665
      %v894 = vpop.f32.mrf.mxu0
      %v895 = vadd.f32 %v314, %v894
      %v896 = vpop.f32.mrf.mxu0
      %v897 = vpop.f32.mrf.mxu0
      %v898 = vadd.f32 %v314, %v897
      %v899 = vpop.f32.mrf.mxu0
      %900 = vmatprep.mubr.bf16.mxu0 0
      %901 = vmatmul.mubr.bf16.gmra.mxu0 %v668
      %v902 = vpop.f32.mrf.mxu0
      %v903 = vadd.f32 %v314, %v902
      %v904 = vpop.f32.mrf.mxu0
      %v905 = vpop.f32.mrf.mxu0
      %v906 = vadd.f32 %v314, %v905
      %v907 = vpop.f32.mrf.mxu0
      %908 = vmatprep.mubr.bf16.mxu0 0
      %909 = vmatmul.mubr.bf16.gmra.mxu0 %v671
      %v910 = vpop.f32.mrf.mxu0
      %v911 = vadd.f32 %v314, %v910
      %v912 = vpop.f32.mrf.mxu0
      %v913 = vpop.f32.mrf.mxu0
      %v914 = vadd.f32 %v314, %v913
      %v915 = vpop.f32.mrf.mxu0
      %916 = vmatprep.mubr.bf16.mxu0 0
      %917 = vmatmul.mubr.bf16.gmra.mxu0 %v674
      %v918 = vpop.f32.mrf.mxu0
      %v919 = vadd.f32 %v314, %v918
      %v920 = vpop.f32.mrf.mxu0
      %v921 = vpop.f32.mrf.mxu0
      %v922 = vadd.f32 %v314, %v921
      %v923 = vpop.f32.mrf.mxu0
      %924 = vmatprep.mubr.bf16.mxu0 0
      %925 = vmatmul.mubr.bf16.gmra.mxu0 %v677
      %v926 = vpop.f32.mrf.mxu0
      %v927 = vadd.f32 %v314, %v926
      %v928 = vpop.f32.mrf.mxu0
      %v929 = vpop.f32.mrf.mxu0
      %v930 = vadd.f32 %v314, %v929
      %v931 = vpop.f32.mrf.mxu0
      %932 = vmatprep.mubr.bf16.mxu0 0
      %933 = vmatmul.mubr.bf16.gmra.mxu0 %v680
      %v934 = vpop.f32.mrf.mxu0
      %v935 = vadd.f32 %v314, %v934
      %v936 = vpop.f32.mrf.mxu0
      %v937 = vpop.f32.mrf.mxu0
      %v938 = vadd.f32 %v314, %v937
      %v939 = vpop.f32.mrf.mxu0
      %940 = vmatprep.mubr.bf16.mxu0 0
      %941 = vmatmul.mubr.bf16.gmra.mxu0 %v683
      %v942 = vpop.f32.mrf.mxu0
      %v943 = vadd.f32 %v314, %v942
      %v944 = vpop.f32.mrf.mxu0
      %v945 = vpop.f32.mrf.mxu0
      %v946 = vadd.f32 %v314, %v945
      %v947 = vpop.f32.mrf.mxu0
      %948 = vmatprep.mubr.bf16.mxu0 0
      %949 = vmatmul.mubr.bf16.gmra.mxu0 %v686
      %v950 = vpop.f32.mrf.mxu0
      %v951 = vadd.f32 %v314, %v950
      %v952 = vpop.f32.mrf.mxu0
      %v953 = vpop.f32.mrf.mxu0
      %v954 = vadd.f32 %v314, %v953
      %v955 = vpop.f32.mrf.mxu0
      %956 = vmatprep.mubr.bf16.mxu0 0
      %957 = vmatmul.mubr.bf16.gmra.mxu0 %v689
      %v958 = vpop.f32.mrf.mxu0
      %v959 = vadd.f32 %v314, %v958
      %v960 = vpop.f32.mrf.mxu0
      %v961 = vpop.f32.mrf.mxu0
      %v962 = vadd.f32 %v314, %v961
      %v963 = vpop.f32.mrf.mxu0
      %964 = vmatprep.mubr.bf16.mxu0 0
      %965 = vmatmul.mubr.bf16.gmra.mxu0 %v692
      %v966 = vpop.f32.mrf.mxu0
      %v967 = vadd.f32 %v314, %v966
      %v968 = vpop.f32.mrf.mxu0
      %v969 = vpop.f32.mrf.mxu0
      %v970 = vadd.f32 %v314, %v969
      %v971 = vpop.f32.mrf.mxu0
      %972 = vmatprep.mubr.bf16.mxu0 0
      %973 = vmatmul.mubr.bf16.gmra.mxu0 %v695
      %v974 = vpop.f32.mrf.mxu0
      %v975 = vadd.f32 %v314, %v974
      %v976 = vpop.f32.mrf.mxu0
      %v977 = vpop.f32.mrf.mxu0
      %v978 = vadd.f32 %v314, %v977
      %v979 = vpop.f32.mrf.mxu0
      %980 = vmatprep.mubr.bf16.mxu0 0
      %981 = vmatmul.mubr.bf16.gmra.mxu0 %v698
      %v982 = vpop.f32.mrf.mxu0
      %v983 = vadd.f32 %v314, %v982
      %v984 = vpop.f32.mrf.mxu0
      %v985 = vpop.f32.mrf.mxu0
      %v986 = vadd.f32 %v314, %v985
      %v987 = vpop.f32.mrf.mxu0
      %988 = vmatprep.mubr.bf16.mxu0 0
      %989 = vmatmul.mubr.bf16.gmra.mxu0 %v701
      %v990 = vpop.f32.mrf.mxu0
      %v991 = vadd.f32 %v314, %v990
      %v992 = vpop.f32.mrf.mxu0
      %v993 = vpop.f32.mrf.mxu0
      %v994 = vadd.f32 %v314, %v993
      %v995 = vpop.f32.mrf.mxu0
      %996 = vmatprep.mubr.bf16.mxu0 0
      %997 = vmatmul.mubr.bf16.gmra.mxu0 %v704
      %v998 = vpop.f32.mrf.mxu0
      %v999 = vadd.f32 %v314, %v998
      %v1000 = vpop.f32.mrf.mxu0
      %v1001 = vpop.f32.mrf.mxu0
      %v1002 = vadd.f32 %v314, %v1001
      %v1003 = vpop.f32.mrf.mxu0
      %1004 = vmatprep.mubr.bf16.mxu0 0
      %1005 = vmatmul.mubr.bf16.gmra.mxu0 %v707
      %v1006 = vpop.f32.mrf.mxu0
      %v1007 = vadd.f32 %v314, %v1006
      %v1008 = vpop.f32.mrf.mxu0
      %v1009 = vpop.f32.mrf.mxu0
      %v1010 = vadd.f32 %v314, %v1009
      %v1011 = vpop.f32.mrf.mxu0
      %1012 = vmatprep.mubr.bf16.mxu0 0
      %1013 = vmatmul.mubr.bf16.gmra.mxu0 %v710
      %v1014 = vpop.f32.mrf.mxu0
      %v1015 = vadd.f32 %v314, %v1014
      %v1016 = vpop.f32.mrf.mxu0
      %v1017 = vpop.f32.mrf.mxu0
      %v1018 = vadd.f32 %v314, %v1017
      %v1019 = vpop.f32.mrf.mxu0
      %1020 = vmatprep.mubr.bf16.mxu0 0
      %1021 = vmatmul.mubr.bf16.gmra.mxu0 %v713
      %v1022 = vpop.f32.mrf.mxu0
      %v1023 = vadd.f32 %v314, %v1022
      %v1024 = vpop.f32.mrf.mxu0
      %v1025 = vpop.f32.mrf.mxu0
      %v1026 = vadd.f32 %v314, %v1025
      %v1027 = vpop.f32.mrf.mxu0
      %1028 = vmatprep.mubr.bf16.mxu0 0
      %1029 = vmatmul.mubr.bf16.gmra.mxu0 %v716
      %v1030 = vpop.f32.mrf.mxu0
      %v1031 = vadd.f32 %v314, %v1030
      %v1032 = vpop.f32.mrf.mxu0
      %v1033 = vpop.f32.mrf.mxu0
      %v1034 = vadd.f32 %v314, %v1033
      %v1035 = vpop.f32.mrf.mxu0
      %1036 = vmatprep.mubr.bf16.mxu0 0
      %1037 = vmatmul.mubr.bf16.gmra.mxu0 %v719
      %v1038 = vpop.f32.mrf.mxu0
      %v1039 = vadd.f32 %v314, %v1038
      %v1040 = vpop.f32.mrf.mxu0
      %v1041 = vpop.f32.mrf.mxu0
      %v1042 = vadd.f32 %v314, %v1041
      %v1043 = vpop.f32.mrf.mxu0
      %1044 = vmatprep.mubr.bf16.mxu0 0
      %1045 = vmatmul.mubr.bf16.gmra.mxu0 %v722
      %v1046 = vpop.f32.mrf.mxu0
      %v1047 = vadd.f32 %v314, %v1046
      %v1048 = vpop.f32.mrf.mxu0
      %v1049 = vpop.f32.mrf.mxu0
      %v1050 = vadd.f32 %v314, %v1049
      %v1051 = vpop.f32.mrf.mxu0
      %1052 = vmatprep.mubr.bf16.mxu0 0
      %1053 = vmatmul.mubr.bf16.gmra.mxu0 %v725
      %v1054 = vpop.f32.mrf.mxu0
      %v1055 = vadd.f32 %v314, %v1054
      %v1056 = vpop.f32.mrf.mxu0
      %v1057 = vpop.f32.mrf.mxu0
      %v1058 = vadd.f32 %v314, %v1057
      %v1059 = vpop.f32.mrf.mxu0
      %1060 = vmatprep.mubr.bf16.mxu0 0
      %1061 = vmatmul.mubr.bf16.gmra.mxu0 %v728
      %v1062 = vpop.f32.mrf.mxu0
      %v1063 = vadd.f32 %v314, %v1062
      %v1064 = vpop.f32.mrf.mxu0
      %v1065 = vpop.f32.mrf.mxu0
      %v1066 = vadd.f32 %v314, %v1065
      %v1067 = vpop.f32.mrf.mxu0
      %1068 = vmatprep.mubr.bf16.mxu0 0
      %1069 = vmatmul.mubr.bf16.gmra.mxu0 %v731
      %v1070 = vpop.f32.mrf.mxu0
      %v1071 = vadd.f32 %v314, %v1070
      %v1072 = vpop.f32.mrf.mxu0
      %v1073 = vpop.f32.mrf.mxu0
      %v1074 = vadd.f32 %v314, %v1073
      %v1075 = vpop.f32.mrf.mxu0
      %1076 = vmatprep.mubr.bf16.mxu0 0
      %1077 = vmatmul.mubr.bf16.gmra.mxu0 %v734
      %v1078 = vpop.f32.mrf.mxu0
      %v1079 = vadd.f32 %v314, %v1078
      %v1080 = vpop.f32.mrf.mxu0
      %v1081 = vpop.f32.mrf.mxu0
      %v1082 = vadd.f32 %v314, %v1081
      %v1083 = vpop.f32.mrf.mxu0
      %1084 = vmatprep.mubr.bf16.mxu0 0
      %1085 = vmatmul.mubr.bf16.gmra.mxu0 %v737
      %v1086 = vpop.f32.mrf.mxu0
      %v1087 = vadd.f32 %v314, %v1086
      %v1088 = vpop.f32.mrf.mxu0
      %v1089 = vpop.f32.mrf.mxu0
      %v1090 = vadd.f32 %v314, %v1089
      %v1091 = vpop.f32.mrf.mxu0
      %1092 = vmatprep.mubr.bf16.mxu0 0
      %1093 = vmatmul.mubr.bf16.gmra.mxu0 %v740
      %v1094 = vpop.f32.mrf.mxu0
      %v1095 = vadd.f32 %v314, %v1094
      %v1096 = vpop.f32.mrf.mxu0
      %v1097 = vpop.f32.mrf.mxu0
      %v1098 = vadd.f32 %v314, %v1097
      %v1099 = vpop.f32.mrf.mxu0
      %1100 = vmatprep.mubr.bf16.mxu0 0
      %1101 = vmatmul.mubr.bf16.gmra.mxu0 %v743
      %v1102 = vpop.f32.mrf.mxu0
      %v1103 = vadd.f32 %v314, %v1102
      %v1104 = vpop.f32.mrf.mxu0
      %v1105 = vpop.f32.mrf.mxu0
      %v1106 = vadd.f32 %v314, %v1105
      %v1107 = vpop.f32.mrf.mxu0
      %1108 = vmatprep.mubr.bf16.mxu0 0
      %1109 = vmatmul.mubr.bf16.gmra.mxu0 %v746
      %v1110 = vpop.f32.mrf.mxu0
      %v1111 = vadd.f32 %v314, %v1110
      %v1112 = vpop.f32.mrf.mxu0
      %v1113 = vpop.f32.mrf.mxu0
      %v1114 = vadd.f32 %v314, %v1113
      %v1115 = vpop.f32.mrf.mxu0
      %1116 = vmatprep.mubr.bf16.mxu0 0
      %1117 = vmatmul.mubr.bf16.gmra.mxu0 %v749
      %v1118 = vpop.f32.mrf.mxu0
      %v1119 = vadd.f32 %v314, %v1118
      %v1120 = vpop.f32.mrf.mxu0
      %v1121 = vpop.f32.mrf.mxu0
      %v1122 = vadd.f32 %v314, %v1121
      %v1123 = vpop.f32.mrf.mxu0
      %1124 = vmatprep.mubr.bf16.mxu0 0
      %1125 = vmatmul.mubr.bf16.gmra.mxu0 %v752
      %v1126 = vpop.f32.mrf.mxu0
      %v1127 = vadd.f32 %v314, %v1126
      %v1128 = vpop.f32.mrf.mxu0
      %v1129 = vpop.f32.mrf.mxu0
      %v1130 = vadd.f32 %v314, %v1129
      %v1131 = vpop.f32.mrf.mxu0
      %1132 = vmatprep.mubr.bf16.mxu0 0
      %1133 = vmatmul.mubr.bf16.gmra.mxu0 %v755
      %v1134 = vpop.f32.mrf.mxu0
      %v1135 = vadd.f32 %v314, %v1134
      %v1136 = vpop.f32.mrf.mxu0
      %v1137 = vpop.f32.mrf.mxu0
      %v1138 = vadd.f32 %v314, %v1137
      %v1139 = vpop.f32.mrf.mxu0
      %1140 = vmatprep.mubr.bf16.mxu0 0
      %1141 = vmatmul.mubr.bf16.gmra.mxu0 %v758
      %v1142 = vpop.f32.mrf.mxu0
      %v1143 = vadd.f32 %v314, %v1142
      %v1144 = vpop.f32.mrf.mxu0
      %v1145 = vpop.f32.mrf.mxu0
      %v1146 = vadd.f32 %v314, %v1145
      %v1147 = vpop.f32.mrf.mxu0
      %1148 = vmatprep.mubr.bf16.mxu0 0
      %1149 = vmatmul.mubr.bf16.gmra.mxu0 %v761
      %v1150 = vpop.f32.mrf.mxu0
      %v1151 = vadd.f32 %v314, %v1150
      %v1152 = vpop.f32.mrf.mxu0
      %v1153 = vpop.f32.mrf.mxu0
      %v1154 = vadd.f32 %v314, %v1153
      %v1155 = vpop.f32.mrf.mxu0
      %1156 = vmatprep.mubr.bf16.mxu0 0
      %1157 = vmatmul.mubr.bf16.gmra.mxu0 %v764
      %v1158 = vpop.f32.mrf.mxu0
      %v1159 = vadd.f32 %v314, %v1158
      %v1160 = vpop.f32.mrf.mxu0
      %v1161 = vpop.f32.mrf.mxu0
      %v1162 = vadd.f32 %v314, %v1161
      %v1163 = vpop.f32.mrf.mxu0
      %1164 = vmatprep.mubr.bf16.mxu0 0
      %1165 = vmatmul.mubr.bf16.gmra.mxu0 %v767
      %v1166 = vpop.f32.mrf.mxu0
      %v1167 = vadd.f32 %v314, %v1166
      %v1168 = vpop.f32.mrf.mxu0
      %v1169 = vpop.f32.mrf.mxu0
      %v1170 = vadd.f32 %v314, %v1169
      %v1171 = vpop.f32.mrf.mxu0
      %1172 = vmatprep.mubr.bf16.mxu0 0
      %1173 = vmatmul.mubr.bf16.gmra.mxu0 %v770
      %v1174 = vpop.f32.mrf.mxu0
      %v1175 = vadd.f32 %v314, %v1174
      %v1176 = vpop.f32.mrf.mxu0
      %v1177 = vpop.f32.mrf.mxu0
      %v1178 = vadd.f32 %v314, %v1177
      %v1179 = vpop.f32.mrf.mxu0
      %1180 = vmatprep.mubr.bf16.mxu0 0
      %1181 = vmatmul.mubr.bf16.gmra.mxu0 %v773
      %v1182 = vpop.f32.mrf.mxu0
      %v1183 = vadd.f32 %v314, %v1182
      %v1184 = vpop.f32.mrf.mxu0
      %v1185 = vpop.f32.mrf.mxu0
      %v1186 = vadd.f32 %v314, %v1185
      %v1187 = vpop.f32.mrf.mxu0
      %1188 = vmatprep.mubr.bf16.mxu0 0
      %1189 = vmatmul.mubr.bf16.gmra.mxu0 %v776
      %v1190 = vpop.f32.mrf.mxu0
      %v1191 = vadd.f32 %v314, %v1190
      %v1192 = vpop.f32.mrf.mxu0
      %v1193 = vpop.f32.mrf.mxu0
      %v1194 = vadd.f32 %v314, %v1193
      %v1195 = vpop.f32.mrf.mxu0
      %1196 = vmatprep.mubr.bf16.mxu0 0
      %1197 = vmatmul.mubr.bf16.gmra.mxu0 %v779
      %v1198 = vpop.f32.mrf.mxu0
      %v1199 = vadd.f32 %v314, %v1198
      %v1200 = vpop.f32.mrf.mxu0
      %v1201 = vpop.f32.mrf.mxu0
      %v1202 = vadd.f32 %v314, %v1201
      %v1203 = vpop.f32.mrf.mxu0
      %1204 = vmatprep.mubr.bf16.mxu0 0
      %1205 = vmatmul.mubr.bf16.gmra.mxu0 %v782
      %v1206 = vpop.f32.mrf.mxu0
      %v1207 = vadd.f32 %v314, %v1206
      %v1208 = vpop.f32.mrf.mxu0
      %v1209 = vpop.f32.mrf.mxu0
      %v1210 = vadd.f32 %v314, %v1209
      %v1211 = vpop.f32.mrf.mxu0
      %1212 = vmatprep.mubr.bf16.mxu0 0
      %1213 = vmatmul.mubr.bf16.gmra.mxu0 %v785
      %v1214 = vpop.f32.mrf.mxu0
      %v1215 = vadd.f32 %v314, %v1214
      %v1216 = vpop.f32.mrf.mxu0
      %v1217 = vpop.f32.mrf.mxu0
      %v1218 = vadd.f32 %v314, %v1217
      %v1219 = vpop.f32.mrf.mxu0
      %1220 = vmatprep.mubr.bf16.mxu0 0
      %1221 = vmatmul.mubr.bf16.gmra.mxu0 %v788
      %v1222 = vpop.f32.mrf.mxu0
      %v1223 = vadd.f32 %v314, %v1222
      %v1224 = vpop.f32.mrf.mxu0
      %v1225 = vpop.f32.mrf.mxu0
      %v1226 = vadd.f32 %v314, %v1225
      %v1227 = vpop.f32.mrf.mxu0
      %1228 = vmatprep.mubr.bf16.mxu0 0
      %1229 = vmatmul.mubr.bf16.gmra.mxu0 %v791
      %v1230 = vpop.f32.mrf.mxu0
      %v1231 = vadd.f32 %v314, %v1230
      %v1232 = vpop.f32.mrf.mxu0
      %v1233 = vpop.f32.mrf.mxu0
      %v1234 = vadd.f32 %v314, %v1233
      %v1235 = vpop.f32.mrf.mxu0
      %1236 = vmatprep.mubr.bf16.mxu0 0
      %1237 = vmatmul.mubr.bf16.gmra.mxu0 %v794
      %v1238 = vpop.f32.mrf.mxu0
      %v1239 = vadd.f32 %v314, %v1238
      %v1240 = vpop.f32.mrf.mxu0
      %v1241 = vpop.f32.mrf.mxu0
      %v1242 = vadd.f32 %v314, %v1241
      %v1243 = vpop.f32.mrf.mxu0
      %1244 = vmatprep.mubr.bf16.mxu0 0
      %1245 = vmatmul.mubr.bf16.gmra.mxu0 %v797
      %v1246 = vpop.f32.mrf.mxu0
      %v1247 = vadd.f32 %v314, %v1246
      %v1248 = vpop.f32.mrf.mxu0
      %v1249 = vpop.f32.mrf.mxu0
      %v1250 = vadd.f32 %v314, %v1249
      %v1251 = vpop.f32.mrf.mxu0
      %1252 = vmatprep.mubr.bf16.mxu0 0
      %1253 = vmatmul.mubr.bf16.gmra.mxu0 %v800
      %v1254 = vpop.f32.mrf.mxu0
      %v1255 = vadd.f32 %v314, %v1254
      %v1256 = vpop.f32.mrf.mxu0
      %v1257 = vpop.f32.mrf.mxu0
      %v1258 = vadd.f32 %v314, %v1257
      %v1259 = vpop.f32.mrf.mxu0
      %1260 = vmatprep.mubr.bf16.mxu0 0
      %1261 = vmatmul.mubr.bf16.gmra.mxu0 %v803
      %v1262 = vpop.f32.mrf.mxu0
      %v1263 = vadd.f32 %v314, %v1262
      %v1264 = vpop.f32.mrf.mxu0
      %v1265 = vpop.f32.mrf.mxu0
      %v1266 = vadd.f32 %v314, %v1265
      %v1267 = vpop.f32.mrf.mxu0
      %1268 = vmatprep.mubr.bf16.mxu0 0
      %1269 = vmatmul.mubr.bf16.gmra.mxu0 %v806
      %v1270 = vpop.f32.mrf.mxu0
      %v1271 = vadd.f32 %v314, %v1270
      %v1272 = vpop.f32.mrf.mxu0
      %v1273 = vpop.f32.mrf.mxu0
      %v1274 = vadd.f32 %v314, %v1273
      %v1275 = vpop.f32.mrf.mxu0
      %1276 = vmatprep.mubr.bf16.mxu0 0
      %1277 = vmatmul.mubr.bf16.gmra.mxu0 %v809
      %v1278 = vpop.f32.mrf.mxu0
      %v1279 = vadd.f32 %v314, %v1278
      %v1280 = vpop.f32.mrf.mxu0
      %v1281 = vpop.f32.mrf.mxu0
      %v1282 = vadd.f32 %v314, %v1281
      %v1283 = vpop.f32.mrf.mxu0
      %1284 = vmatprep.mubr.bf16.mxu0 0
      %1285 = vmatmul.mubr.bf16.gmra.mxu0 %v812
      %v1286 = vpop.f32.mrf.mxu0
      %v1287 = vadd.f32 %v314, %v1286
      %v1288 = vpop.f32.mrf.mxu0
      %v1289 = vpop.f32.mrf.mxu0
      %v1290 = vadd.f32 %v314, %v1289
      %v1291 = vpop.f32.mrf.mxu0
      %1292 = vmatprep.mubr.bf16.mxu0 0
      %1293 = vmatmul.mubr.bf16.gmra.mxu0 %v815
      %v1294 = vpop.f32.mrf.mxu0
      %v1295 = vadd.f32 %v314, %v1294
      %v1296 = vpop.f32.mrf.mxu0
      %v1297 = vpop.f32.mrf.mxu0
      %v1298 = vadd.f32 %v314, %v1297
      %v1299 = vpop.f32.mrf.mxu0
      %1300 = vmatprep.mubr.bf16.mxu0 0
      %1301 = vmatmul.mubr.bf16.gmra.mxu0 %v818
      %v1302 = vpop.f32.mrf.mxu0
      %v1303 = vadd.f32 %v314, %v1302
      %v1304 = vpop.f32.mrf.mxu0
      %v1305 = vpop.f32.mrf.mxu0
      %v1306 = vadd.f32 %v314, %v1305
      %v1307 = vpop.f32.mrf.mxu0
      %1308 = vmatprep.mubr.bf16.mxu0 0
      %1309 = vmatmul.mubr.bf16.gmra.mxu0 %v821
      %v1310 = vpop.f32.mrf.mxu0
      %v1311 = vadd.f32 %v314, %v1310
      %v1312 = vpop.f32.mrf.mxu0
      %v1313 = vpop.f32.mrf.mxu0
      %v1314 = vadd.f32 %v314, %v1313
      %v1315 = vpop.f32.mrf.mxu0
      %1316 = vmatprep.mubr.bf16.mxu0 0
      %1317 = vmatmul.mubr.bf16.gmra.mxu0 %v824
      %v1318 = vpop.f32.mrf.mxu0
      %v1319 = vadd.f32 %v314, %v1318
      %v1320 = vpop.f32.mrf.mxu0
      %v1321 = vpop.f32.mrf.mxu0
      %v1322 = vadd.f32 %v314, %v1321
      %v1323 = vpop.f32.mrf.mxu0
      %1324 = vmatprep.mubr.bf16.mxu0 0
      %1325 = vmatmul.mubr.bf16.gmra.mxu0 %v827
      %v1326 = vpop.f32.mrf.mxu0
      %v1327 = vadd.f32 %v314, %v1326
      %v1328 = vpop.f32.mrf.mxu0
      %v1329 = vpop.f32.mrf.mxu0
      %v1330 = vadd.f32 %v314, %v1329
      %v1331 = vpop.f32.mrf.mxu0
      %1332 = vmatprep.mubr.bf16.mxu0 0
      %1333 = vmatmul.mubr.bf16.gmra.mxu0 %v830
      %v1334 = vpop.f32.mrf.mxu0
      %v1335 = vadd.f32 %v314, %v1334
      %v1336 = vpop.f32.mrf.mxu0
      %v1337 = vpop.f32.mrf.mxu0
      %v1338 = vadd.f32 %v314, %v1337
      %v1339 = vpop.f32.mrf.mxu0
      %1340 = vmatprep.mubr.bf16.mxu0 0
      %1341 = vmatmul.mubr.bf16.gmra.mxu0 %v833
      %v1342 = vpop.f32.mrf.mxu0
      %v1343 = vadd.f32 %v314, %v1342
      %v1344 = vpop.f32.mrf.mxu0
      %v1345 = vpop.f32.mrf.mxu0
      %v1346 = vadd.f32 %v314, %v1345
      %v1347 = vpop.f32.mrf.mxu0
      %1348 = vmatprep.mubr.bf16.mxu0 0
      %1349 = vmatmul.mubr.bf16.gmra.mxu0 %v836
      %v1350 = vpop.f32.mrf.mxu0
      %v1351 = vadd.f32 %v314, %v1350
      %v1352 = vpop.f32.mrf.mxu0
      %v1353 = vpop.f32.mrf.mxu0
      %v1354 = vadd.f32 %v314, %v1353
      %v1355 = vpop.f32.mrf.mxu0
      %1356 = vmatprep.mubr.bf16.mxu0 0
      %1357 = vmatmul.mubr.bf16.gmra.mxu0 %v839
      %v1358 = vpop.f32.mrf.mxu0
      %v1359 = vadd.f32 %v314, %v1358
      %v1360 = vpop.f32.mrf.mxu0
      %v1361 = vpop.f32.mrf.mxu0
      %v1362 = vadd.f32 %v314, %v1361
      %v1363 = vpop.f32.mrf.mxu0
      %1364 = vmatprep.mubr.bf16.mxu0 0
      %1365 = vmatmul.mubr.bf16.gmra.mxu0 %v842
      %v1366 = vpop.f32.mrf.mxu0
      %v1367 = vadd.f32 %v314, %v1366
      %v1368 = vpop.f32.mrf.mxu0
      %v1369 = vpop.f32.mrf.mxu0
      %v1370 = vadd.f32 %v314, %v1369
      %v1371 = vpop.f32.mrf.mxu0
      %1372 = vmatprep.mubr.bf16.mxu0 0
      %1373 = vmatmul.mubr.bf16.gmra.mxu0 %v845
      %v1374 = vpop.f32.mrf.mxu0
      %v1375 = vadd.f32 %v314, %v1374
      %v1376 = vpop.f32.mrf.mxu0
      %v1377 = vpop.f32.mrf.mxu0
      %v1378 = vadd.f32 %v314, %v1377
      %v1379 = vpop.f32.mrf.mxu0
      %1380 = vmatprep.mubr.bf16.mxu0 0
      %1381 = vmatmul.mubr.bf16.gmra.mxu0 %v848
      %v1382 = vpop.f32.mrf.mxu0
      %v1383 = vadd.f32 %v314, %v1382
      %v1384 = vpop.f32.mrf.mxu0
      %v1385 = vpop.f32.mrf.mxu0
      %v1386 = vadd.f32 %v314, %v1385
      %v1387 = vpop.f32.mrf.mxu0
      %1388 = vmatprep.mubr.bf16.mxu0 0
      %1389 = vmatmul.mubr.bf16.gmra.mxu0 %v851
      %v1390 = vpop.f32.mrf.mxu0
      %v1391 = vadd.f32 %v314, %v1390
      %v1392 = vpop.f32.mrf.mxu0
      %v1393 = vpop.f32.mrf.mxu0
      %v1394 = vadd.f32 %v314, %v1393
      %v1395 = vpop.f32.mrf.mxu0
      %1396 = vmatprep.mubr.bf16.mxu0 0
      %1397 = vmatmul.mubr.bf16.gmra.mxu0 %v854
      %v1398 = vpop.f32.mrf.mxu0
      %v1399 = vadd.f32 %v314, %v1398
      %v1400 = vpop.f32.mrf.mxu0
      %v1401 = vpop.f32.mrf.mxu0
      %v1402 = vadd.f32 %v314, %v1401
      %v1403 = vpop.f32.mrf.mxu0
      %1404 = vdwg.mxu0
      %v1405 = vmax.f32 %v895, 0.0
      %v1406 = vmax.f32 %v898, 0.0
      %v1407 = vmax.f32 %v903, 0.0
      %v1408 = vmax.f32 %v906, 0.0
      %v1409 = vmax.f32 %v911, 0.0
      %v1410 = vmax.f32 %v914, 0.0
      %v1411 = vmax.f32 %v919, 0.0
      %v1412 = vmax.f32 %v922, 0.0
      %v1413 = vmax.f32 %v927, 0.0
      %v1414 = vmax.f32 %v930, 0.0
      %v1415 = vmax.f32 %v935, 0.0
      %v1416 = vmax.f32 %v938, 0.0
      %v1417 = vmax.f32 %v943, 0.0
      %v1418 = vmax.f32 %v946, 0.0
      %v1419 = vmax.f32 %v951, 0.0
      %v1420 = vmax.f32 %v954, 0.0
      %v1421 = vmax.f32 %v959, 0.0
      %v1422 = vmax.f32 %v962, 0.0
      %v1423 = vmax.f32 %v967, 0.0
      %v1424 = vmax.f32 %v970, 0.0
      %v1425 = vmax.f32 %v975, 0.0
      %v1426 = vmax.f32 %v978, 0.0
      %v1427 = vmax.f32 %v983, 0.0
      %v1428 = vmax.f32 %v986, 0.0
      %v1429 = vmax.f32 %v991, 0.0
      %v1430 = vmax.f32 %v994, 0.0
      %v1431 = vmax.f32 %v999, 0.0
      %v1432 = vmax.f32 %v1002, 0.0
      %v1433 = vmax.f32 %v1007, 0.0
      %v1434 = vmax.f32 %v1010, 0.0
      %v1435 = vmax.f32 %v1015, 0.0
      %v1436 = vmax.f32 %v1018, 0.0
      %v1437 = vmax.f32 %v1023, 0.0
      %v1438 = vmax.f32 %v1026, 0.0
      %v1439 = vmax.f32 %v1031, 0.0
      %v1440 = vmax.f32 %v1034, 0.0
      %v1441 = vmax.f32 %v1039, 0.0
      %v1442 = vmax.f32 %v1042, 0.0
      %v1443 = vmax.f32 %v1047, 0.0
      %v1444 = vmax.f32 %v1050, 0.0
      %v1445 = vmax.f32 %v1055, 0.0
      %v1446 = vmax.f32 %v1058, 0.0
      %v1447 = vmax.f32 %v1063, 0.0
      %v1448 = vmax.f32 %v1066, 0.0
      %v1449 = vmax.f32 %v1071, 0.0
      %v1450 = vmax.f32 %v1074, 0.0
      %v1451 = vmax.f32 %v1079, 0.0
      %v1452 = vmax.f32 %v1082, 0.0
      %v1453 = vmax.f32 %v1087, 0.0
      %v1454 = vmax.f32 %v1090, 0.0
      %v1455 = vmax.f32 %v1095, 0.0
      %v1456 = vmax.f32 %v1098, 0.0
      %v1457 = vmax.f32 %v1103, 0.0
      %v1458 = vmax.f32 %v1106, 0.0
      %v1459 = vmax.f32 %v1111, 0.0
      %v1460 = vmax.f32 %v1114, 0.0
      %v1461 = vmax.f32 %v1119, 0.0
      %v1462 = vmax.f32 %v1122, 0.0
      %v1463 = vmax.f32 %v1127, 0.0
      %v1464 = vmax.f32 %v1130, 0.0
      %v1465 = vmax.f32 %v1135, 0.0
      %v1466 = vmax.f32 %v1138, 0.0
      %v1467 = vmax.f32 %v1143, 0.0
      %v1468 = vmax.f32 %v1146, 0.0
      %v1469 = vmax.f32 %v1151, 0.0
      %v1470 = vmax.f32 %v1154, 0.0
      %v1471 = vmax.f32 %v1159, 0.0
      %v1472 = vmax.f32 %v1162, 0.0
      %v1473 = vmax.f32 %v1167, 0.0
      %v1474 = vmax.f32 %v1170, 0.0
      %v1475 = vmax.f32 %v1175, 0.0
      %v1476 = vmax.f32 %v1178, 0.0
      %v1477 = vmax.f32 %v1183, 0.0
      %v1478 = vmax.f32 %v1186, 0.0
      %v1479 = vmax.f32 %v1191, 0.0
      %v1480 = vmax.f32 %v1194, 0.0
      %v1481 = vmax.f32 %v1199, 0.0
      %v1482 = vmax.f32 %v1202, 0.0
      %v1483 = vmax.f32 %v1207, 0.0
      %v1484 = vmax.f32 %v1210, 0.0
      %v1485 = vmax.f32 %v1215, 0.0
      %v1486 = vmax.f32 %v1218, 0.0
      %v1487 = vmax.f32 %v1223, 0.0
      %v1488 = vmax.f32 %v1226, 0.0
      %v1489 = vmax.f32 %v1231, 0.0
      %v1490 = vmax.f32 %v1234, 0.0
      %v1491 = vmax.f32 %v1239, 0.0
      %v1492 = vmax.f32 %v1242, 0.0
      %v1493 = vmax.f32 %v1247, 0.0
      %v1494 = vmax.f32 %v1250, 0.0
      %v1495 = vmax.f32 %v1255, 0.0
      %v1496 = vmax.f32 %v1258, 0.0
      %v1497 = vmax.f32 %v1263, 0.0
      %v1498 = vmax.f32 %v1266, 0.0
      %v1499 = vmax.f32 %v1271, 0.0
      %v1500 = vmax.f32 %v1274, 0.0
      %v1501 = vmax.f32 %v1279, 0.0
      %v1502 = vmax.f32 %v1282, 0.0
      %v1503 = vmax.f32 %v1287, 0.0
      %v1504 = vmax.f32 %v1290, 0.0
      %v1505 = vmax.f32 %v1295, 0.0
      %v1506 = vmax.f32 %v1298, 0.0
      %v1507 = vmax.f32 %v1303, 0.0
      %v1508 = vmax.f32 %v1306, 0.0
      %v1509 = vmax.f32 %v1311, 0.0
      %v1510 = vmax.f32 %v1314, 0.0
      %v1511 = vmax.f32 %v1319, 0.0
      %v1512 = vmax.f32 %v1322, 0.0
      %v1513 = vmax.f32 %v1327, 0.0
      %v1514 = vmax.f32 %v1330, 0.0
      %v1515 = vmax.f32 %v1335, 0.0
      %v1516 = vmax.f32 %v1338, 0.0
      %v1517 = vmax.f32 %v1343, 0.0
      %v1518 = vmax.f32 %v1346, 0.0
      %v1519 = vmax.f32 %v1351, 0.0
      %v1520 = vmax.f32 %v1354, 0.0
      %v1521 = vmax.f32 %v1359, 0.0
      %v1522 = vmax.f32 %v1362, 0.0
      %v1523 = vmax.f32 %v1367, 0.0
      %v1524 = vmax.f32 %v1370, 0.0
      %v1525 = vmax.f32 %v1375, 0.0
      %v1526 = vmax.f32 %v1378, 0.0
      %v1527 = vmax.f32 %v1383, 0.0
      %v1528 = vmax.f32 %v1386, 0.0
      %v1529 = vmax.f32 %v1391, 0.0
      %v1530 = vmax.f32 %v1394, 0.0
      %v1531 = vmax.f32 %v1399, 0.0
      %v1532 = vmax.f32 %v1402, 0.0
      %vm1533 = vcmask 523264
      %1534 = vst.msk [vmem:[%s170] sm:$0xff] %vm1533, %v1405
      %1535 = vst.msk [vmem:[%s170 + $0x8] sm:$0xff] %vm1533, %v1406
      %1536 = vst.msk [vmem:[%s170 + $0x10] sm:$0xff] %vm1533, %v1407
      %1537 = vst.msk [vmem:[%s170 + $0x18] sm:$0xff] %vm1533, %v1408
      %1538 = vst.msk [vmem:[%s170 + $0x20] sm:$0xff] %vm1533, %v1409
      %1539 = vst.msk [vmem:[%s170 + $0x28] sm:$0xff] %vm1533, %v1410
      %1540 = vst.msk [vmem:[%s170 + $0x30] sm:$0xff] %vm1533, %v1411
      %1541 = vst.msk [vmem:[%s170 + $0x38] sm:$0xff] %vm1533, %v1412
      %1542 = vst.msk [vmem:[%s170 + $0x40] sm:$0xff] %vm1533, %v1413
      %1543 = vst.msk [vmem:[%s170 + $0x48] sm:$0xff] %vm1533, %v1414
      %1544 = vst.msk [vmem:[%s170 + $0x50] sm:$0xff] %vm1533, %v1415
      %1545 = vst.msk [vmem:[%s170 + $0x58] sm:$0xff] %vm1533, %v1416
      %1546 = vst.msk [vmem:[%s170 + $0x60] sm:$0xff] %vm1533, %v1417
      %1547 = vst.msk [vmem:[%s170 + $0x68] sm:$0xff] %vm1533, %v1418
      %1548 = vst.msk [vmem:[%s170 + $0x70] sm:$0xff] %vm1533, %v1419
      %1549 = vst.msk [vmem:[%s170 + $0x78] sm:$0xff] %vm1533, %v1420
      %1550 = vst.msk [vmem:[%s170 + $0x80] sm:$0xff] %vm1533, %v1421
      %1551 = vst.msk [vmem:[%s170 + $0x88] sm:$0xff] %vm1533, %v1422
      %1552 = vst.msk [vmem:[%s170 + $0x90] sm:$0xff] %vm1533, %v1423
      %1553 = vst.msk [vmem:[%s170 + $0x98] sm:$0xff] %vm1533, %v1424
      %1554 = vst.msk [vmem:[%s170 + $0xa0] sm:$0xff] %vm1533, %v1425
      %1555 = vst.msk [vmem:[%s170 + $0xa8] sm:$0xff] %vm1533, %v1426
      %1556 = vst.msk [vmem:[%s170 + $0xb0] sm:$0xff] %vm1533, %v1427
      %1557 = vst.msk [vmem:[%s170 + $0xb8] sm:$0xff] %vm1533, %v1428
      %1558 = vst.msk [vmem:[%s170 + $0xc0] sm:$0xff] %vm1533, %v1429
      %1559 = vst.msk [vmem:[%s170 + $0xc8] sm:$0xff] %vm1533, %v1430
      %1560 = vst.msk [vmem:[%s170 + $0xd0] sm:$0xff] %vm1533, %v1431
      %1561 = vst.msk [vmem:[%s170 + $0xd8] sm:$0xff] %vm1533, %v1432
      %1562 = vst.msk [vmem:[%s170 + $0xe0] sm:$0xff] %vm1533, %v1433
      %1563 = vst.msk [vmem:[%s170 + $0xe8] sm:$0xff] %vm1533, %v1434
      %1564 = vst.msk [vmem:[%s170 + $0xf0] sm:$0xff] %vm1533, %v1435
      %1565 = vst.msk [vmem:[%s170 + $0xf8] sm:$0xff] %vm1533, %v1436
      %1566 = vst.msk [vmem:[%s170 + $0x100] sm:$0xff] %vm1533, %v1437
      %1567 = vst.msk [vmem:[%s170 + $0x108] sm:$0xff] %vm1533, %v1438
      %1568 = vst.msk [vmem:[%s170 + $0x110] sm:$0xff] %vm1533, %v1439
      %1569 = vst.msk [vmem:[%s170 + $0x118] sm:$0xff] %vm1533, %v1440
      %1570 = vst.msk [vmem:[%s170 + $0x120] sm:$0xff] %vm1533, %v1441
      %1571 = vst.msk [vmem:[%s170 + $0x128] sm:$0xff] %vm1533, %v1442
      %1572 = vst.msk [vmem:[%s170 + $0x130] sm:$0xff] %vm1533, %v1443
      %1573 = vst.msk [vmem:[%s170 + $0x138] sm:$0xff] %vm1533, %v1444
      %1574 = vst.msk [vmem:[%s170 + $0x140] sm:$0xff] %vm1533, %v1445
      %1575 = vst.msk [vmem:[%s170 + $0x148] sm:$0xff] %vm1533, %v1446
      %1576 = vst.msk [vmem:[%s170 + $0x150] sm:$0xff] %vm1533, %v1447
      %1577 = vst.msk [vmem:[%s170 + $0x158] sm:$0xff] %vm1533, %v1448
      %1578 = vst.msk [vmem:[%s170 + $0x160] sm:$0xff] %vm1533, %v1449
      %1579 = vst.msk [vmem:[%s170 + $0x168] sm:$0xff] %vm1533, %v1450
      %1580 = vst.msk [vmem:[%s170 + $0x170] sm:$0xff] %vm1533, %v1451
      %1581 = vst.msk [vmem:[%s170 + $0x178] sm:$0xff] %vm1533, %v1452
      %1582 = vst.msk [vmem:[%s170 + $0x180] sm:$0xff] %vm1533, %v1453
      %1583 = vst.msk [vmem:[%s170 + $0x188] sm:$0xff] %vm1533, %v1454
      %1584 = vst.msk [vmem:[%s170 + $0x190] sm:$0xff] %vm1533, %v1455
      %1585 = vst.msk [vmem:[%s170 + $0x198] sm:$0xff] %vm1533, %v1456
      %1586 = vst.msk [vmem:[%s170 + $0x1a0] sm:$0xff] %vm1533, %v1457
      %1587 = vst.msk [vmem:[%s170 + $0x1a8] sm:$0xff] %vm1533, %v1458
      %1588 = vst.msk [vmem:[%s170 + $0x1b0] sm:$0xff] %vm1533, %v1459
      %1589 = vst.msk [vmem:[%s170 + $0x1b8] sm:$0xff] %vm1533, %v1460
      %1590 = vst.msk [vmem:[%s170 + $0x1c0] sm:$0xff] %vm1533, %v1461
      %1591 = vst.msk [vmem:[%s170 + $0x1c8] sm:$0xff] %vm1533, %v1462
      %1592 = vst.msk [vmem:[%s170 + $0x1d0] sm:$0xff] %vm1533, %v1463
      %1593 = vst.msk [vmem:[%s170 + $0x1d8] sm:$0xff] %vm1533, %v1464
      %1594 = vst.msk [vmem:[%s170 + $0x1e0] sm:$0xff] %vm1533, %v1465
      %1595 = vst.msk [vmem:[%s170 + $0x1e8] sm:$0xff] %vm1533, %v1466
      %1596 = vst.msk [vmem:[%s170 + $0x1f0] sm:$0xff] %vm1533, %v1467
      %1597 = vst.msk [vmem:[%s170 + $0x1f8] sm:$0xff] %vm1533, %v1468
      %1598 = vst.msk [vmem:[%s170 + $0x200] sm:$0xff] %vm1533, %v1469
      %1599 = vst.msk [vmem:[%s170 + $0x208] sm:$0xff] %vm1533, %v1470
      %1600 = vst.msk [vmem:[%s170 + $0x210] sm:$0xff] %vm1533, %v1471
      %1601 = vst.msk [vmem:[%s170 + $0x218] sm:$0xff] %vm1533, %v1472
      %1602 = vst.msk [vmem:[%s170 + $0x220] sm:$0xff] %vm1533, %v1473
      %1603 = vst.msk [vmem:[%s170 + $0x228] sm:$0xff] %vm1533, %v1474
      %1604 = vst.msk [vmem:[%s170 + $0x230] sm:$0xff] %vm1533, %v1475
      %1605 = vst.msk [vmem:[%s170 + $0x238] sm:$0xff] %vm1533, %v1476
      %1606 = vst.msk [vmem:[%s170 + $0x240] sm:$0xff] %vm1533, %v1477
      %1607 = vst.msk [vmem:[%s170 + $0x248] sm:$0xff] %vm1533, %v1478
      %1608 = vst.msk [vmem:[%s170 + $0x250] sm:$0xff] %vm1533, %v1479
      %1609 = vst.msk [vmem:[%s170 + $0x258] sm:$0xff] %vm1533, %v1480
      %1610 = vst.msk [vmem:[%s170 + $0x260] sm:$0xff] %vm1533, %v1481
      %1611 = vst.msk [vmem:[%s170 + $0x268] sm:$0xff] %vm1533, %v1482
      %1612 = vst.msk [vmem:[%s170 + $0x270] sm:$0xff] %vm1533, %v1483
      %1613 = vst.msk [vmem:[%s170 + $0x278] sm:$0xff] %vm1533, %v1484
      %1614 = vst.msk [vmem:[%s170 + $0x280] sm:$0xff] %vm1533, %v1485
      %1615 = vst.msk [vmem:[%s170 + $0x288] sm:$0xff] %vm1533, %v1486
      %1616 = vst.msk [vmem:[%s170 + $0x290] sm:$0xff] %vm1533, %v1487
      %1617 = vst.msk [vmem:[%s170 + $0x298] sm:$0xff] %vm1533, %v1488
      %1618 = vst.msk [vmem:[%s170 + $0x2a0] sm:$0xff] %vm1533, %v1489
      %1619 = vst.msk [vmem:[%s170 + $0x2a8] sm:$0xff] %vm1533, %v1490
      %1620 = vst.msk [vmem:[%s170 + $0x2b0] sm:$0xff] %vm1533, %v1491
      %1621 = vst.msk [vmem:[%s170 + $0x2b8] sm:$0xff] %vm1533, %v1492
      %1622 = vst.msk [vmem:[%s170 + $0x2c0] sm:$0xff] %vm1533, %v1493
      %1623 = vst.msk [vmem:[%s170 + $0x2c8] sm:$0xff] %vm1533, %v1494
      %1624 = vst.msk [vmem:[%s170 + $0x2d0] sm:$0xff] %vm1533, %v1495
      %1625 = vst.msk [vmem:[%s170 + $0x2d8] sm:$0xff] %vm1533, %v1496
      %1626 = vst.msk [vmem:[%s170 + $0x2e0] sm:$0xff] %vm1533, %v1497
      %1627 = vst.msk [vmem:[%s170 + $0x2e8] sm:$0xff] %vm1533, %v1498
      %1628 = vst.msk [vmem:[%s170 + $0x2f0] sm:$0xff] %vm1533, %v1499
      %1629 = vst.msk [vmem:[%s170 + $0x2f8] sm:$0xff] %vm1533, %v1500
      %1630 = vst.msk [vmem:[%s170 + $0x300] sm:$0xff] %vm1533, %v1501
      %1631 = vst.msk [vmem:[%s170 + $0x308] sm:$0xff] %vm1533, %v1502
      %1632 = vst.msk [vmem:[%s170 + $0x310] sm:$0xff] %vm1533, %v1503
      %1633 = vst.msk [vmem:[%s170 + $0x318] sm:$0xff] %vm1533, %v1504
      %1634 = vst.msk [vmem:[%s170 + $0x320] sm:$0xff] %vm1533, %v1505
      %1635 = vst.msk [vmem:[%s170 + $0x328] sm:$0xff] %vm1533, %v1506
      %1636 = vst.msk [vmem:[%s170 + $0x330] sm:$0xff] %vm1533, %v1507
      %1637 = vst.msk [vmem:[%s170 + $0x338] sm:$0xff] %vm1533, %v1508
      %1638 = vst.msk [vmem:[%s170 + $0x340] sm:$0xff] %vm1533, %v1509
      %1639 = vst.msk [vmem:[%s170 + $0x348] sm:$0xff] %vm1533, %v1510
      %1640 = vst.msk [vmem:[%s170 + $0x350] sm:$0xff] %vm1533, %v1511
      %1641 = vst.msk [vmem:[%s170 + $0x358] sm:$0xff] %vm1533, %v1512
      %1642 = vst.msk [vmem:[%s170 + $0x360] sm:$0xff] %vm1533, %v1513
      %1643 = vst.msk [vmem:[%s170 + $0x368] sm:$0xff] %vm1533, %v1514
      %1644 = vst.msk [vmem:[%s170 + $0x370] sm:$0xff] %vm1533, %v1515
      %1645 = vst.msk [vmem:[%s170 + $0x378] sm:$0xff] %vm1533, %v1516
      %1646 = vst.msk [vmem:[%s170 + $0x380] sm:$0xff] %vm1533, %v1517
      %1647 = vst.msk [vmem:[%s170 + $0x388] sm:$0xff] %vm1533, %v1518
      %1648 = vst.msk [vmem:[%s170 + $0x390] sm:$0xff] %vm1533, %v1519
      %1649 = vst.msk [vmem:[%s170 + $0x398] sm:$0xff] %vm1533, %v1520
      %1650 = vst.msk [vmem:[%s170 + $0x3a0] sm:$0xff] %vm1533, %v1521
      %1651 = vst.msk [vmem:[%s170 + $0x3a8] sm:$0xff] %vm1533, %v1522
      %1652 = vst.msk [vmem:[%s170 + $0x3b0] sm:$0xff] %vm1533, %v1523
      %1653 = vst.msk [vmem:[%s170 + $0x3b8] sm:$0xff] %vm1533, %v1524
      %1654 = vst.msk [vmem:[%s170 + $0x3c0] sm:$0xff] %vm1533, %v1525
      %1655 = vst.msk [vmem:[%s170 + $0x3c8] sm:$0xff] %vm1533, %v1526
      %1656 = vst.msk [vmem:[%s170 + $0x3d0] sm:$0xff] %vm1533, %v1527
      %1657 = vst.msk [vmem:[%s170 + $0x3d8] sm:$0xff] %vm1533, %v1528
      %1658 = vst.msk [vmem:[%s170 + $0x3e0] sm:$0xff] %vm1533, %v1529
      %1659 = vst.msk [vmem:[%s170 + $0x3e8] sm:$0xff] %vm1533, %v1530
      %1660 = vst.msk [vmem:[%s170 + $0x3f0] sm:$0xff] %vm1533, %v1531
      %1661 = vst.msk [vmem:[%s170 + $0x3f8] sm:$0xff] %vm1533, %v1532
      %p1662 = scmp.lt.s32.totalorder %s14, 1
      %s1663 = scalar_select %p1662, %s14, 1
      %s1664 = smul.addr %s1663, 128
      %s1665 = smul.addr %s1664, 8
      %s1666 = scalar_lea.vmem %s3, %s1665
      // Predicated region
      $region33: #{tpu_custom_call.1} parent=31 // pred_check
        %p1667 = pneg %p100
      $region34: #{tpu_custom_call.1} parent=31 // pred_check_branch
        %1669 = sbr.rel (%p1667) target = $region36
      $region35: #{tpu_custom_call.1} parent=31 // pred_region
        _
      $region36: #{tpu_custom_call.1} parent=31 // pred_fallthru
        _
    $region32: #{tpu_custom_call.1} parent=5 // pred_fallthru
      _
    %p1670 = scmp.le.s32.totalorder 2, %s9
    // Predicated region
    $region37: #{tpu_custom_call.1} parent=5 // pred_check
      %p1671 = pneg %p1670
    $region38: #{tpu_custom_call.1} parent=5 // pred_check_branch
      %1673 = sbr.rel (%p1671) target = $region40
    $region39: #{tpu_custom_call.1} parent=5 // pred_region
      %s1674 = ssub.s32 %s9, 2
      // Predicated region
      $region41: #{tpu_custom_call.1} parent=39 // pred_check
        %p1675 = pneg %p106
      $region42: #{tpu_custom_call.1} parent=39 // pred_check_branch
        %1677 = sbr.rel (%p1675) target = $region44
      $region43: #{tpu_custom_call.1} parent=39 // pred_region
        %p1678 = scmp.lt.s32.totalorder %s15, 1
        %s1679 = scalar_select %p1678, %s15, 1
        %s1680 = smul.addr %s1679, 128
        %s1681 = smul.addr %s1680, 8
        %s1682 = scalar_lea.vmem %s3, %s1681
      $region44: #{tpu_custom_call.1} parent=39 // pred_fallthru
        _
    $region40: #{tpu_custom_call.1} parent=5 // pred_fallthru
      _
  $region6: #{tpu_custom_call.1} parent=0 // loop_footer
    %s13 = sadd.s32 1, %s9
  $region7: #{tpu_custom_call.1} parent=0 // loop_footer_branch
    %8 = sbr.rel target = $region3
  $region8: #{tpu_custom_call.1} parent=0 // loop_exit
    _

</llo_original>
